<compile_context>
chip_gen: v7x
topology: tpu7x:2x2x1
jax: 0.10.0
libtpu: 0.0.40
codegen_flags: <defaults>
</compile_context>

<pallas_src>
import functools

import jax
import jax.numpy as jnp
from jax.experimental import pallas as pl
from jax.experimental.pallas import tpu as pltpu


_NEG_BIG = -1e30                       # bias for padded vocab columns
_OUT_BLOCK_BYTES = 4 * 1024 * 1024     # target size of one pass-2 output buffer
_VMEM_LIMIT = 32 * 1024 * 1024         # safe scoped limit on v5e/v6e/v7x


def _round_up(x, m):
    return (x + m - 1) // m * m


def _divisors_desc(n):
    ds = set()
    i = 1
    while i * i <= n:
        if n % i == 0:
            ds.add(i)
            ds.add(n // i)
        i += 1
    return sorted(ds, reverse=True)


def _pick_vocab_tile(V):
    """Lane-dense vocab tile width and padded vocab width."""
    v128 = _round_up(V, 128)
    cands = (2048, 1024, 512, 256, 128)
    if V == v128:
        # Exact-width output (no slice copy): largest candidate dividing V.
        tn = max(c for c in cands if c <= v128 and v128 % c == 0)
        return tn, v128
    # Vocab needs padding anyway -> take the largest candidate tile.
    tn = max(c for c in cands if c <= v128)
    return tn, _round_up(v128, tn)


def _pick_time_fold(T, B, tn, out_bytes):
    """Largest divisor Tt of T whose (Tt*B, tn) output block fits the budget;
    prefer sublane-dense (Tt*B % 8 == 0) or full-T blocks."""
    fits = [t for t in _divisors_desc(T)
            if t * B * tn * out_bytes <= _OUT_BLOCK_BYTES and t <= 128]
    for t in fits:
        if (t * B) % 8 == 0 or t == T:
            return t
    if fits:
        return fits[0]  # TODO(synk): non-sublane-dense fallback (rare shapes)
    return 1


# ---------------------------------------------------------------------------
# Pass 1: online logsumexp of decoder(ivec) over lane-dense vocab tiles.
# grid = (vocab_splits, vocab_tiles_per_split); splits are "parallel" so both
# v7x TensorCores get work even when the batch is a single row tile.
# ---------------------------------------------------------------------------
def _lse_kernel(iv_ref, wd_ref, bd_ref, out_ref, m_scr, l_scr):
    j = pl.program_id(1)

    @pl.when(j == 0)
    def _init():
        m_scr[...] = jnp.full_like(m_scr, -jnp.inf)
        l_scr[...] = jnp.zeros_like(l_scr)

    # bf16 operands on the MXU, f32 accumulation; softmax math stays in f32.
    z = (jnp.dot(iv_ref[...], wd_ref[...], preferred_element_type=jnp.float32)
         + bd_ref[...])                                        # (B, tn) f32

    m_prev = m_scr[...]
    m_new = jnp.maximum(m_prev, jnp.max(z, axis=-1, keepdims=True))
    l_scr[...] = (l_scr[...] * jnp.exp(m_prev - m_new)
                  + jnp.sum(jnp.exp(z - m_new), axis=-1, keepdims=True))
    m_scr[...] = m_new

    @pl.when(j == pl.num_programs(1) - 1)
    def _finalize():
        out_ref[0] = m_scr[...] + jnp.log(l_scr[...])          # partial lse


# ---------------------------------------------------------------------------
# Pass 2: normalized log-probs written into the flat (T*B, V_pad) output.
# Each grid step recomputes its (B, tn) logits (K = ivec_dim is tiny) and
# replicates them across t_fold folded time steps inside one large, dense
# output block -> big writeback DMAs, no cross-step state, all-parallel grid.
# ---------------------------------------------------------------------------
def _decode_kernel(iv_ref, wd_ref, bd_ref, lse_ref, out_ref, *, t_fold, batch):
    z = (jnp.dot(iv_ref[...], wd_ref[...], preferred_element_type=jnp.float32)
         + bd_ref[...])
    tile = (z - lse_ref[...]).astype(out_ref.dtype)            # (B, tn)
    for k in range(t_fold):                                    # static unroll
        out_ref[pl.ds(k * batch, batch), :] = tile


def ivec_logprobs_stacked(ivec, dec_w_t, dec_b, T, *,
                          compute_dtype=jnp.bfloat16,
                          out_dtype=jnp.float32):
    """log_softmax(ivec @ dec_w_t + dec_b, -1) replicated T times -> (T,B,V)."""
    B, D = ivec.shape
    V = dec_w_t.shape[-1]

    tn, V_pad = _pick_vocab_tile(V)
    vt = V_pad // tn
    out_bytes = jnp.dtype(out_dtype).itemsize
    Tt = _pick_time_fold(T, B, tn, out_bytes)
    rows_grid = T // Tt

    # Pad the (tiny) decoder params so every vocab tile is full; padded
    # columns get bias -1e30 so they never contribute to the logsumexp.
    wd = dec_w_t
    bd = dec_b.reshape(1, V).astype(jnp.float32)
    if V_pad != V:
        wd = jnp.pad(wd, ((0, 0), (0, V_pad - V)))
        bd = jnp.pad(bd, ((0, 0), (0, V_pad - V)), constant_values=_NEG_BIG)
    iv = ivec.astype(compute_dtype)
    wd = wd.astype(compute_dtype)

    in_bytes = (iv.size * iv.dtype.itemsize + wd.size * wd.dtype.itemsize
                + bd.size * 4)
    flops = 2 * B * D * V_pad

    # --- pass 1: per-row logsumexp, vocab split into parallel shards --------
    S = 2 if (vt % 2 == 0 and vt >= 2) else 1
    vt_s = vt // S

    part = pl.pallas_call(
        _lse_kernel,
        out_shape=jax.ShapeDtypeStruct((S, B, 1), jnp.float32),
        grid_spec=pltpu.PrefetchScalarGridSpec(
            num_scalar_prefetch=0,
            grid=(S, vt_s),
            in_specs=[
                pl.BlockSpec((B, D), lambda s, j: (0, 0)),
                pl.BlockSpec((D, tn), lambda s, j: (0, s * vt_s + j)),
                pl.BlockSpec((1, tn), lambda s, j: (0, s * vt_s + j)),
            ],
            out_specs=pl.BlockSpec((1, B, 1), lambda s, j: (s, 0, 0)),
            scratch_shapes=[pltpu.VMEM((B, 1), jnp.float32),
                            pltpu.VMEM((B, 1), jnp.float32)],
        ),
        compiler_params=pltpu.CompilerParams(
            dimension_semantics=("parallel", "arbitrary"),
            vmem_limit_bytes=_VMEM_LIMIT),
        cost_estimate=pl.CostEstimate(
            flops=flops, transcendentals=B * V_pad,
            bytes_accessed=in_bytes + S * B * 4),
    )(iv, wd, bd)

    if S == 1:
        lse = part[0]                                   # (B, 1) f32
    else:
        m = jnp.max(part, axis=0)
        lse = m + jnp.log(jnp.sum(jnp.exp(part - m), axis=0))

    # --- pass 2: normalize, replicate over folded time, large dense blocks --
    flat_rows = T * B
    decode = functools.partial(_decode_kernel, t_fold=Tt, batch=B)

    out_flat = pl.pallas_call(
        decode,
        out_shape=jax.ShapeDtypeStruct((flat_rows, V_pad), out_dtype),
        grid_spec=pltpu.PrefetchScalarGridSpec(
            num_scalar_prefetch=0,
            grid=(rows_grid, vt),
            in_specs=[
                pl.BlockSpec((B, D), lambda i, j: (0, 0)),
                pl.BlockSpec((D, tn), lambda i, j: (0, j)),
                pl.BlockSpec((1, tn), lambda i, j: (0, j)),
                pl.BlockSpec((B, 1), lambda i, j: (0, 0)),
            ],
            out_specs=pl.BlockSpec((Tt * B, tn), lambda i, j: (i, j)),
        ),
        compiler_params=pltpu.CompilerParams(
            dimension_semantics=("parallel", "parallel"),
            vmem_limit_bytes=_VMEM_LIMIT),
        cost_estimate=pl.CostEstimate(
            flops=flops * rows_grid, transcendentals=0,
            bytes_accessed=rows_grid * (in_bytes + B * 4)
            + flat_rows * V_pad * out_bytes),
    )(iv, wd, bd, lse)

    decoded = out_flat.reshape(T, B, V_pad)     # free: row-major metadata only
    if V_pad != V:
        # TODO(synk): fallback slice materializes one extra copy of the output;
        # vocabularies that are multiples of 128 take the exact-width path.
        decoded = decoded[:, :, :V]
    return decoded


# ---------------------------------------------------------------------------
# IvecOnlyLM.forward: tokens only contribute T, hidden returned unchanged,
# dropout is never applied in forward().
# ---------------------------------------------------------------------------
def forward(params, tokens, hidden, ivec):
    T = tokens.shape[0]
    decoded = ivec_logprobs_stacked(ivec, params["dec_w_t"], params["dec_b"], T)
    return decoded, hidden


# ---------------------------------------------------------------------------
# Parameters (mirrors __init__ / init_weights) and init_hidden.
# ---------------------------------------------------------------------------
def make_params(key, ntoken, ivec_dim):
    initrange = 0.1
    dec_w = jax.random.uniform(key, (ntoken, ivec_dim), jnp.float32,
                               -initrange, initrange)    # decoder.weight
    dec_b = jnp.zeros((ntoken,), jnp.float32)            # decoder.bias = 0
    return {
        "dec_w_t": dec_w.T,       # (ivec_dim, ntoken), f32 master copy
        "dec_b": dec_b,
    }


def init_hidden(bsz, ivec_dim):
    return jnp.zeros((1, bsz, ivec_dim), jnp.float32)


# ---------------------------------------------------------------------------
# Self-test
# ---------------------------------------------------------------------------
def _reference(ivec, dec_w_t, dec_b, T, compute_dtype=jnp.bfloat16):
    z = (jnp.dot(ivec.astype(compute_dtype), dec_w_t.astype(compute_dtype),
                 preferred_element_type=jnp.float32)
         + dec_b.reshape(1, -1).astype(jnp.float32))
    logp = jax.nn.log_softmax(z, axis=-1)
    return jnp.broadcast_to(logp[None], (T,) + logp.shape)


def _check_case(key, ntoken, ivec_dim, T, B):
    kp, kt, ki = jax.random.split(key, 3)
    params = make_params(kp, ntoken, ivec_dim)
    tokens = jax.random.randint(kt, (T, B), 0, ntoken, dtype=jnp.int32)
    ivec = jax.random.normal(ki, (B, ivec_dim), jnp.float32)
    hidden = init_hidden(B, ivec_dim)

    fwd = jax.jit(functools.partial(forward, params))
    decoded, hidden_out = fwd(tokens, hidden, ivec)
    jax.block_until_ready((decoded, hidden_out))

    ref = _reference(ivec, params["dec_w_t"], params["dec_b"], T)

    assert decoded.shape == (T, B, ntoken)
    assert hidden_out.shape == (1, B, ivec_dim)
    assert bool(jnp.all(jnp.isfinite(decoded)))
    row_sums = jnp.sum(jnp.exp(decoded), axis=-1)
    assert bool(jnp.all(jnp.abs(row_sums - 1.0) < 1e-3))
    assert bool(jnp.max(jnp.abs(decoded - ref)) < 1e-4)
    # torch.stack([logprobs] * T): all time slices must be identical
    assert bool(jnp.max(jnp.abs(decoded - decoded[0][None])) == 0.0)


if __name__ == "__main__":
    key = jax.random.PRNGKey(0)
    k1, k2 = jax.random.split(key)
    # Main case: 4 vocab tiles of 2048 -> online lse over 2 tiles per parallel
    # shard; all 8 time steps folded into one (16, 2048) output block per tile.
    _check_case(k1, ntoken=8192, ivec_dim=16, T=8, B=2)
    # Robustness case: vocab not a multiple of 128 (padding path), odd T and B.
    _check_case(k2, ntoken=1000, ivec_dim=16, T=5, B=3)
    print("KERNEL_OK")
</pallas_src>

<mosaic_0001>
module attributes {stable_mosaic.version = 11 : i64} {
  func.func @_lse_kernel(%arg0: i32, %arg1: i32, %arg2: memref<2x16xbf16, #tpu.memory_space<vmem>>, %arg3: memref<16x2048xbf16, #tpu.memory_space<vmem>>, %arg4: memref<1x2048xf32, #tpu.memory_space<vmem>>, %arg5: memref<1x2x1xf32, #tpu.memory_space<vmem>>, %arg6: memref<2x1xf32, #tpu.memory_space<vmem>>, %arg7: memref<2x1xf32, #tpu.memory_space<vmem>>) attributes {dimension_semantics = [#tpu.dimension_semantics<parallel>, #tpu.dimension_semantics<arbitrary>], iteration_bounds = array<i64: 2, 2>, scalar_prefetch = 0 : i64, scratch_operands = 2 : i64, tpu.core_type = #tpu.core_type<tc>, window_params = [{pipeline_mode = #tpu.pipeline_mode<synchronous>, transform_indices = @transform_0, window_bounds = array<i64: 2, 16>}, {transform_indices = @transform_1, window_bounds = array<i64: 16, 2048>}, {transform_indices = @transform_2, window_bounds = array<i64: 1, 2048>}, {transform_indices = @transform_3, window_bounds = array<i64: 1, 2, 1>}]} {
    %c0_i32 = arith.constant 0 : i32
    %0 = arith.cmpi eq, %arg1, %c0_i32 : i32
    %1 = arith.extui %0 : i1 to i32
    %c0_i32_0 = arith.constant 0 : i32
    %2 = arith.cmpi ne, %1, %c0_i32_0 : i32
    scf.if %2 {
      %cst_17 = arith.constant 0xFF800000 : f32
      %28 = vector.broadcast %cst_17 : f32 to vector<2x1xf32>
      %c0_18 = arith.constant 0 : index
      %c0_19 = arith.constant 0 : index
      %29 = vector.load %arg6[%c0_18, %c0_19] : memref<2x1xf32, #tpu.memory_space<vmem>>, vector<2x1xf32>
      tpu.vector_store %arg6[%c0_18, %c0_19], %28 {strides = array<i32>} : memref<2x1xf32, #tpu.memory_space<vmem>>, vector<2x1xf32>,
      %cst_20 = arith.constant 0.000000e+00 : f32
      %30 = vector.broadcast %cst_20 : f32 to vector<2x1xf32>
      %c0_21 = arith.constant 0 : index
      %c0_22 = arith.constant 0 : index
      %31 = vector.load %arg7[%c0_21, %c0_22] : memref<2x1xf32, #tpu.memory_space<vmem>>, vector<2x1xf32>
      tpu.vector_store %arg7[%c0_21, %c0_22], %30 {strides = array<i32>} : memref<2x1xf32, #tpu.memory_space<vmem>>, vector<2x1xf32>,
    } else {
    }
    %c0 = arith.constant 0 : index
    %c0_1 = arith.constant 0 : index
    %3 = vector.load %arg2[%c0, %c0_1] : memref<2x16xbf16, #tpu.memory_space<vmem>>, vector<2x16xbf16>
    %c0_2 = arith.constant 0 : index
    %c0_3 = arith.constant 0 : index
    %4 = vector.load %arg3[%c0_2, %c0_3] : memref<16x2048xbf16, #tpu.memory_space<vmem>>, vector<16x2048xbf16>
    %cst = arith.constant dense<0.000000e+00> : vector<2x2048xf32>
    %5 = tpu.matmul %3, %4, %cst {dimension_numbers = #tpu.dot_dimension_numbers<[1], [0], [0], [1], [0, 0, 1, 1], [], []>} : vector<2x16xbf16>, vector<16x2048xbf16>, vector<2x2048xf32> -> vector<2x2048xf32>
    %c0_4 = arith.constant 0 : index
    %c0_5 = arith.constant 0 : index
    %6 = vector.load %arg4[%c0_4, %c0_5] : memref<1x2048xf32, #tpu.memory_space<vmem>>, vector<1x2048xf32>
    %7 = vector.broadcast %6 : vector<1x2048xf32> to vector<2x2048xf32>
    %8 = arith.addf %5, %7 : vector<2x2048xf32>
    %c0_6 = arith.constant 0 : index
    %c0_7 = arith.constant 0 : index
    %9 = vector.load %arg6[%c0_6, %c0_7] : memref<2x1xf32, #tpu.memory_space<vmem>>, vector<2x1xf32>
    %cst_8 = arith.constant dense<0xFF800000> : vector<2xf32>
    %10 = vector.multi_reduction <maximumf>, %8, %cst_8 [1] : vector<2x2048xf32> to vector<2xf32>
    %11 = vector.shape_cast %10 : vector<2xf32> to vector<2x1xf32>
    %12 = arith.maximumf %9, %11 : vector<2x1xf32>
    %c0_9 = arith.constant 0 : index
    %c0_10 = arith.constant 0 : index
    %13 = vector.load %arg7[%c0_9, %c0_10] : memref<2x1xf32, #tpu.memory_space<vmem>>, vector<2x1xf32>
    %14 = arith.subf %9, %12 : vector<2x1xf32>
    %15 = math.exp %14 : vector<2x1xf32>
    %16 = arith.mulf %13, %15 : vector<2x1xf32>
    %17 = vector.broadcast %12 : vector<2x1xf32> to vector<2x2048xf32>
    %18 = arith.subf %8, %17 : vector<2x2048xf32>
    %19 = math.exp %18 : vector<2x2048xf32>
    %cst_11 = arith.constant dense<0.000000e+00> : vector<2xf32>
    %20 = vector.multi_reduction <add>, %19, %cst_11 [1] : vector<2x2048xf32> to vector<2xf32>
    %21 = vector.shape_cast %20 : vector<2xf32> to vector<2x1xf32>
    %22 = arith.addf %16, %21 : vector<2x1xf32>
    %c0_12 = arith.constant 0 : index
    %c0_13 = arith.constant 0 : index
    %23 = vector.load %arg7[%c0_12, %c0_13] : memref<2x1xf32, #tpu.memory_space<vmem>>, vector<2x1xf32>
    tpu.vector_store %arg7[%c0_12, %c0_13], %22 {strides = array<i32>} : memref<2x1xf32, #tpu.memory_space<vmem>>, vector<2x1xf32>,
    %c0_14 = arith.constant 0 : index
    %c0_15 = arith.constant 0 : index
    %24 = vector.load %arg6[%c0_14, %c0_15] : memref<2x1xf32, #tpu.memory_space<vmem>>, vector<2x1xf32>
    tpu.vector_store %arg6[%c0_14, %c0_15], %12 {strides = array<i32>} : memref<2x1xf32, #tpu.memory_space<vmem>>, vector<2x1xf32>,
    %c1_i32 = arith.constant 1 : i32
    %25 = arith.cmpi eq, %arg1, %c1_i32 : i32
    %26 = arith.extui %25 : i1 to i32
    %c0_i32_16 = arith.constant 0 : i32
    %27 = arith.cmpi ne, %26, %c0_i32_16 : i32
    scf.if %27 {
      %c0_17 = arith.constant 0 : index
      %c0_18 = arith.constant 0 : index
      %28 = vector.load %arg6[%c0_17, %c0_18] : memref<2x1xf32, #tpu.memory_space<vmem>>, vector<2x1xf32>
      %c0_19 = arith.constant 0 : index
      %c0_20 = arith.constant 0 : index
      %29 = vector.load %arg7[%c0_19, %c0_20] : memref<2x1xf32, #tpu.memory_space<vmem>>, vector<2x1xf32>
      %30 = math.log %29 : vector<2x1xf32>
      %31 = arith.addf %28, %30 : vector<2x1xf32>
      %c0_21 = arith.constant 0 : index
      %c0_22 = arith.constant 0 : index
      %c0_23 = arith.constant 0 : index
      %32 = vector.load %arg5[%c0_21, %c0_22, %c0_23] : memref<1x2x1xf32, #tpu.memory_space<vmem>>, vector<1x2x1xf32>
      %33 = vector.shape_cast %32 : vector<1x2x1xf32> to vector<2x1xf32>
      %34 = vector.shape_cast %31 : vector<2x1xf32> to vector<1x2x1xf32>
      tpu.vector_store %arg5[%c0_21, %c0_22, %c0_23], %34 {strides = array<i32>} : memref<1x2x1xf32, #tpu.memory_space<vmem>>, vector<1x2x1xf32>,
    } else {
    }
    return
  }
  func.func @transform_0(%arg0: i32, %arg1: i32) -> (i32, i32) {
    %c0_i32 = arith.constant 0 : i32
    %c0_i32_0 = arith.constant 0 : i32
    %c0_i32_1 = arith.constant 0 : i32
    return %c0_i32, %c0_i32_0 : i32, i32
  }
  func.func @transform_1(%arg0: i32, %arg1: i32) -> (i32, i32) {
    %c2_i32 = arith.constant 2 : i32
    %0 = arith.muli %arg0, %c2_i32 : i32
    %1 = arith.addi %0, %arg1 : i32
    %c0_i32 = arith.constant 0 : i32
    %c0_i32_0 = arith.constant 0 : i32
    return %c0_i32, %1 : i32, i32
  }
  func.func @transform_2(%arg0: i32, %arg1: i32) -> (i32, i32) {
    %c2_i32 = arith.constant 2 : i32
    %0 = arith.muli %arg0, %c2_i32 : i32
    %1 = arith.addi %0, %arg1 : i32
    %c0_i32 = arith.constant 0 : i32
    %c0_i32_0 = arith.constant 0 : i32
    return %c0_i32, %1 : i32, i32
  }
  func.func @transform_3(%arg0: i32, %arg1: i32) -> (i32, i32, i32) {
    %c0_i32 = arith.constant 0 : i32
    %c0_i32_0 = arith.constant 0 : i32
    %c0_i32_1 = arith.constant 0 : i32
    return %arg0, %c0_i32, %c0_i32_0 : i32, i32, i32
  }
}

module attributes {stable_mosaic.version = 11 : i64} {
  func.func @_decode_kernel(%arg0: i32, %arg1: i32, %arg2: memref<2x16xbf16, #tpu.memory_space<vmem>>, %arg3: memref<16x2048xbf16, #tpu.memory_space<vmem>>, %arg4: memref<1x2048xf32, #tpu.memory_space<vmem>>, %arg5: memref<2x1xf32, #tpu.memory_space<vmem>>, %arg6: memref<16x2048xf32, #tpu.memory_space<vmem>>) attributes {dimension_semantics = [#tpu.dimension_semantics<parallel>, #tpu.dimension_semantics<parallel>], iteration_bounds = array<i64: 1, 4>, scalar_prefetch = 0 : i64, scratch_operands = 0 : i64, tpu.core_type = #tpu.core_type<tc>, window_params = [{pipeline_mode = #tpu.pipeline_mode<synchronous>, transform_indices = @transform_0, window_bounds = array<i64: 2, 16>}, {transform_indices = @transform_1, window_bounds = array<i64: 16, 2048>}, {transform_indices = @transform_2, window_bounds = array<i64: 1, 2048>}, {pipeline_mode = #tpu.pipeline_mode<synchronous>, transform_indices = @transform_3, window_bounds = array<i64: 2, 1>}, {transform_indices = @transform_4, window_bounds = array<i64: 16, 2048>}]} {
    %c0 = arith.constant 0 : index
    %c0_0 = arith.constant 0 : index
    %0 = vector.load %arg2[%c0, %c0_0] : memref<2x16xbf16, #tpu.memory_space<vmem>>, vector<2x16xbf16>
    %c0_1 = arith.constant 0 : index
    %c0_2 = arith.constant 0 : index
    %1 = vector.load %arg3[%c0_1, %c0_2] : memref<16x2048xbf16, #tpu.memory_space<vmem>>, vector<16x2048xbf16>
    %cst = arith.constant dense<0.000000e+00> : vector<2x2048xf32>
    %2 = tpu.matmul %0, %1, %cst {dimension_numbers = #tpu.dot_dimension_numbers<[1], [0], [0], [1], [0, 0, 1, 1], [], []>} : vector<2x16xbf16>, vector<16x2048xbf16>, vector<2x2048xf32> -> vector<2x2048xf32>
    %c0_3 = arith.constant 0 : index
    %c0_4 = arith.constant 0 : index
    %3 = vector.load %arg4[%c0_3, %c0_4] : memref<1x2048xf32, #tpu.memory_space<vmem>>, vector<1x2048xf32>
    %4 = vector.broadcast %3 : vector<1x2048xf32> to vector<2x2048xf32>
    %5 = arith.addf %2, %4 : vector<2x2048xf32>
    %c0_5 = arith.constant 0 : index
    %c0_6 = arith.constant 0 : index
    %6 = vector.load %arg5[%c0_5, %c0_6] : memref<2x1xf32, #tpu.memory_space<vmem>>, vector<2x1xf32>
    %7 = vector.broadcast %6 : vector<2x1xf32> to vector<2x2048xf32>
    %8 = arith.subf %5, %7 : vector<2x2048xf32>
    %c0_7 = arith.constant 0 : index
    %c0_8 = arith.constant 0 : index
    %9 = vector.load %arg6[%c0_7, %c0_8] : memref<16x2048xf32, #tpu.memory_space<vmem>>, vector<2x2048xf32>
    tpu.vector_store %arg6[%c0_7, %c0_8], %8 {strides = array<i32>} : memref<16x2048xf32, #tpu.memory_space<vmem>>, vector<2x2048xf32>,
    %c2 = arith.constant 2 : index
    %c0_9 = arith.constant 0 : index
    %10 = vector.load %arg6[%c2, %c0_9] : memref<16x2048xf32, #tpu.memory_space<vmem>>, vector<2x2048xf32>
    tpu.vector_store %arg6[%c2, %c0_9], %8 {strides = array<i32>} : memref<16x2048xf32, #tpu.memory_space<vmem>>, vector<2x2048xf32>,
    %c4 = arith.constant 4 : index
    %c0_10 = arith.constant 0 : index
    %11 = vector.load %arg6[%c4, %c0_10] : memref<16x2048xf32, #tpu.memory_space<vmem>>, vector<2x2048xf32>
    tpu.vector_store %arg6[%c4, %c0_10], %8 {strides = array<i32>} : memref<16x2048xf32, #tpu.memory_space<vmem>>, vector<2x2048xf32>,
    %c6 = arith.constant 6 : index
    %c0_11 = arith.constant 0 : index
    %12 = vector.load %arg6[%c6, %c0_11] : memref<16x2048xf32, #tpu.memory_space<vmem>>, vector<2x2048xf32>
    tpu.vector_store %arg6[%c6, %c0_11], %8 {strides = array<i32>} : memref<16x2048xf32, #tpu.memory_space<vmem>>, vector<2x2048xf32>,
    %c8 = arith.constant 8 : index
    %c0_12 = arith.constant 0 : index
    %13 = vector.load %arg6[%c8, %c0_12] : memref<16x2048xf32, #tpu.memory_space<vmem>>, vector<2x2048xf32>
    tpu.vector_store %arg6[%c8, %c0_12], %8 {strides = array<i32>} : memref<16x2048xf32, #tpu.memory_space<vmem>>, vector<2x2048xf32>,
    %c10 = arith.constant 10 : index
    %c0_13 = arith.constant 0 : index
    %14 = vector.load %arg6[%c10, %c0_13] : memref<16x2048xf32, #tpu.memory_space<vmem>>, vector<2x2048xf32>
    tpu.vector_store %arg6[%c10, %c0_13], %8 {strides = array<i32>} : memref<16x2048xf32, #tpu.memory_space<vmem>>, vector<2x2048xf32>,
    %c12 = arith.constant 12 : index
    %c0_14 = arith.constant 0 : index
    %15 = vector.load %arg6[%c12, %c0_14] : memref<16x2048xf32, #tpu.memory_space<vmem>>, vector<2x2048xf32>
    tpu.vector_store %arg6[%c12, %c0_14], %8 {strides = array<i32>} : memref<16x2048xf32, #tpu.memory_space<vmem>>, vector<2x2048xf32>,
    %c14 = arith.constant 14 : index
    %c0_15 = arith.constant 0 : index
    %16 = vector.load %arg6[%c14, %c0_15] : memref<16x2048xf32, #tpu.memory_space<vmem>>, vector<2x2048xf32>
    tpu.vector_store %arg6[%c14, %c0_15], %8 {strides = array<i32>} : memref<16x2048xf32, #tpu.memory_space<vmem>>, vector<2x2048xf32>,
    return
  }
  func.func @transform_0(%arg0: i32, %arg1: i32) -> (i32, i32) {
    %c0_i32 = arith.constant 0 : i32
    %c0_i32_0 = arith.constant 0 : i32
    %c0_i32_1 = arith.constant 0 : i32
    return %c0_i32, %c0_i32_0 : i32, i32
  }
  func.func @transform_1(%arg0: i32, %arg1: i32) -> (i32, i32) {
    %c0_i32 = arith.constant 0 : i32
    %c0_i32_0 = arith.constant 0 : i32
    return %c0_i32, %arg1 : i32, i32
  }
  func.func @transform_2(%arg0: i32, %arg1: i32) -> (i32, i32) {
    %c0_i32 = arith.constant 0 : i32
    %c0_i32_0 = arith.constant 0 : i32
    return %c0_i32, %arg1 : i32, i32
  }
  func.func @transform_3(%arg0: i32, %arg1: i32) -> (i32, i32) {
    %c0_i32 = arith.constant 0 : i32
    %c0_i32_0 = arith.constant 0 : i32
    %c0_i32_1 = arith.constant 0 : i32
    return %c0_i32, %c0_i32_0 : i32, i32
  }
  func.func @transform_4(%arg0: i32, %arg1: i32) -> (i32, i32) {
    %c0_i32 = arith.constant 0 : i32
    return %arg0, %arg1 : i32, i32
  }
}

</mosaic_0001>

<llo_original>
// kernel: forward.2
$region0: #{forward.2}
  #allocation0 [shape = 'u32[]', space=smem, size = 0x4, offset = 0x4, fixed_abs, tag = 'smem constant byte address 0x4 - core index']
  #allocation1 [shape = 'u32[144,128]{1,0:T(1,128)}', space=vmem, size = 0x12000, scoped, tag = 'internal scratch']
  #allocation2 [shape = 'f32[2,1]{1,0:T(2,128)}', space=vmem, size = 0x400, scoped, tag = 'scratch operand']
  #allocation3 [shape = 'f32[2,1]{1,0:T(2,128)}', space=vmem, size = 0x400, scoped, tag = 'scratch operand']
  %s0 = inlined_call_operand.vmem [shape: bf16[2,16], index: 0, kind: input, shape index: {}]
  %s1 = inlined_call_operand.vmem [shape: bf16[16,8192], index: 1, kind: input, shape index: {}]
  %s2 = inlined_call_operand.vmem [shape: f32[1,8192], index: 2, kind: input, shape index: {}]
  %s3 = inlined_call_operand.vmem [shape: f32[2,2,1], index: 3, kind: output, shape index: {}]
  %s4 = sld [smem:[#allocation0]]
  $region76: #{forward.2} parent=0
    _
  %s6 = ssub.s32 1, %s4
  %s7 = scalar_select 0, %s6, %s4
  $region1: #{forward.2} parent=0
    #allocation4 [shape = 'u8[131072]{0}', space=vmem, size = 0x20000, scoped, tag = 'input window, operand 1']
    loop: start=0, step=1, limit=6
    $region2: #{forward.2} parent=1 // loop_pre_header
      _
    $region3: #{forward.2} parent=1 // loop_header
      %s9 = sphi 0, %s13
      %p10 = scmp.ge.s32.totalorder %s9, 6
      %s16 = sphi 0, %s28
      %s17 = sphi 0, %s24
      %s18 = sphi 0, %s16
      %s19 = sphi 0, %s17
      %s20 = sphi 0, %s18
      %s21 = sphi 0, %s19
      %s29 = sphi 0, %s29
      %s31 = sphi 0, %s29
      %s32 = sphi 0, %s31
      %s46 = sphi 0, %s32
      %s56 = sphi 0, %s58
      %s59 = sphi 0, %s56
      %s60 = sphi 0, %s59
      %s76 = sphi 0, %s60
      %s86 = sphi 0, %s88
      %s89 = sphi 0, %s86
      %s90 = sphi 0, %s89
      %s106 = sphi 0, %s90
      %s112 = sphi 0, %s114
      %s115 = sphi 0, %s112
      %s116 = sphi 0, %s115
      %s132 = sphi 0, %s116
    $region4: #{forward.2} parent=1 // loop_header_branch
      %12 = sbr.rel (%p10) target = $region8
    $region5: #{forward.2} parent=1 // loop_body
      %s14 = ssub.s32 %s9, 1
      %s15 = ssub.s32 %s9, 2
      %s22 = sadd.s32 1, %s17
      %p23 = scmp.ge.s32.totalorder %s22, 2
      %s24 = scalar_select %p23, 0, %s22
      %s25 = sadd.s32 1, %s16
      %s26 = scalar_select %p23, %s25, %s16
      %p27 = scmp.ge.s32.totalorder %s26, 2
      %s28 = scalar_select %p27, 0, %s26
      %s30 = sadd.s32 %s29, 1
      %p33 = scmp.eq.s32.totalorder %s9, 3
      %p34 = scmp.ne.s32.totalorder %s29, %s31
      %p35 = scmp.eq.s32.totalorder %s9, 0
      %p36 = por %p34, %p35
      %p37 = scmp.ne.s32.totalorder %s29, %s31
      %p38 = scmp.eq.s32.totalorder %s14, 3
      %p39 = por %p37, %p38
      %p40 = scmp.ne.s32.totalorder %s31, %s32
      %p41 = scmp.eq.s32.totalorder %s14, 0
      %p42 = por %p40, %p41
      %p43 = scmp.ne.s32.totalorder %s31, %s32
      %p44 = scmp.eq.s32.totalorder %s15, 3
      %p45 = por %p43, %p44
      %p47 = scmp.ne.s32.totalorder %s32, %s46
      %p48 = scmp.eq.s32.totalorder %s15, 0
      %p49 = por %p47, %p48
      %s50 = smul.u32 %s16, 2
      %s51 = sadd.s32 %s50, %s17
      %s52 = smul.u32 %s28, 2
      %s53 = sadd.s32 %s52, %s24
      %s54 = ssub.s32 %s51, %s53
      %p55 = scmp.eq.s32.totalorder %s54, 0
      %s57 = sadd.s32 %s56, 1
      %s58 = scalar_select %p55, %s56, %s57
      %p61 = pneg %p55
      %p62 = scmp.eq.s32.totalorder %s9, 3
      %p63 = por %p61, %p62
      %p64 = scmp.ne.s32.totalorder %s56, %s59
      %p65 = scmp.eq.s32.totalorder %s9, 0
      %p66 = por %p64, %p65
      %p67 = scmp.ne.s32.totalorder %s56, %s59
      %p68 = scmp.eq.s32.totalorder %s14, 3
      %p69 = por %p67, %p68
      %p70 = scmp.ne.s32.totalorder %s59, %s60
      %p71 = scmp.eq.s32.totalorder %s14, 0
      %p72 = por %p70, %p71
      %p73 = scmp.ne.s32.totalorder %s59, %s60
      %p74 = scmp.eq.s32.totalorder %s15, 3
      %p75 = por %p73, %p74
      %p77 = scmp.ne.s32.totalorder %s60, %s76
      %p78 = scmp.eq.s32.totalorder %s15, 0
      %p79 = por %p77, %p78
      %s80 = smul.u32 %s16, 2
      %s81 = sadd.s32 %s80, %s17
      %s82 = smul.u32 %s28, 2
      %s83 = sadd.s32 %s82, %s24
      %s84 = ssub.s32 %s81, %s83
      %p85 = scmp.eq.s32.totalorder %s84, 0
      %s87 = sadd.s32 %s86, 1
      %s88 = scalar_select %p85, %s86, %s87
      %p91 = pneg %p85
      %p92 = scmp.eq.s32.totalorder %s9, 3
      %p93 = por %p91, %p92
      %p94 = scmp.ne.s32.totalorder %s86, %s89
      %p95 = scmp.eq.s32.totalorder %s9, 0
      %p96 = por %p94, %p95
      %p97 = scmp.ne.s32.totalorder %s86, %s89
      %p98 = scmp.eq.s32.totalorder %s14, 3
      %p99 = por %p97, %p98
      %p100 = scmp.ne.s32.totalorder %s89, %s90
      %p101 = scmp.eq.s32.totalorder %s14, 0
      %p102 = por %p100, %p101
      %p103 = scmp.ne.s32.totalorder %s89, %s90
      %p104 = scmp.eq.s32.totalorder %s15, 3
      %p105 = por %p103, %p104
      %p107 = scmp.ne.s32.totalorder %s90, %s106
      %p108 = scmp.eq.s32.totalorder %s15, 0
      %p109 = por %p107, %p108
      %s110 = ssub.s32 %s16, %s28
      %p111 = scmp.eq.s32.totalorder %s110, 0
      %s113 = sadd.s32 %s112, 1
      %s114 = scalar_select %p111, %s112, %s113
      %p117 = pneg %p111
      %p118 = scmp.eq.s32.totalorder %s9, 3
      %p119 = por %p117, %p118
      %p120 = scmp.ne.s32.totalorder %s112, %s115
      %p121 = scmp.eq.s32.totalorder %s9, 0
      %p122 = por %p120, %p121
      %p123 = scmp.ne.s32.totalorder %s112, %s115
      %p124 = scmp.eq.s32.totalorder %s14, 3
      %p125 = por %p123, %p124
      %p126 = scmp.ne.s32.totalorder %s115, %s116
      %p127 = scmp.eq.s32.totalorder %s14, 0
      %p128 = por %p126, %p127
      %p129 = scmp.ne.s32.totalorder %s115, %s116
      %p130 = scmp.eq.s32.totalorder %s15, 3
      %p131 = por %p129, %p130
      %p133 = scmp.ne.s32.totalorder %s116, %s132
      %p134 = scmp.eq.s32.totalorder %s15, 0
      %p135 = por %p133, %p134
      %p136 = scmp.le.s32.totalorder 1, %s9
      %p137 = scmp.lt.s32.totalorder %s9, 5
      %p138 = pnand %p136, %p137
      %p139 = pneg %p138
      // Predicated region
      $region9: #{forward.2} parent=5 // pred_check
        _
      $region10: #{forward.2} parent=5 // pred_check_branch
        %141 = sbr.rel (%p138) target = $region12
      $region11: #{forward.2} parent=5 // pred_region
        %s142 = ssub.s32 %s9, 1
        // Predicated region
        $region13: #{forward.2} parent=11 // pred_check
          %p143 = pneg %p42
        $region14: #{forward.2} parent=11 // pred_check_branch
          %145 = sbr.rel (%p143) target = $region16
        $region15: #{forward.2} parent=11 // pred_region
          _
        $region16: #{forward.2} parent=11 // pred_fallthru
          _
      $region12: #{forward.2} parent=5 // pred_fallthru
        _
      %p146 = scmp.lt.s32.totalorder %s9, 4
      // Predicated region
      $region17: #{forward.2} parent=5 // pred_check
        %p147 = pneg %p146
      $region18: #{forward.2} parent=5 // pred_check_branch
        %149 = sbr.rel (%p147) target = $region20
      $region19: #{forward.2} parent=5 // pred_region
        // Predicated region
        $region21: #{forward.2} parent=19 // pred_check
          %p150 = pneg %p66
        $region22: #{forward.2} parent=19 // pred_check_branch
          %152 = sbr.rel (%p150) target = $region24
        $region23: #{forward.2} parent=19 // pred_region
          %s153 = sand.u32 %s56, 1
          %s154 = sand.u32 %s56, 1
          %s155 = smul.addr %s154, 128
          %s156 = scalar_lea.vmem [#allocation4], %s155
          %s157 = smul.u32 %s16, 2
          %s158 = sadd.s32 %s157, %s17
          %s159 = smul.u32 16, %s158
          %s160 = smul.addr %s159, 4
          %s161 = scalar_lea.vmem %s1, %s160
          // Predicated region
          $region25: #{forward.2} parent=23 // pred_check
            _
          $region26: #{forward.2} parent=23 // pred_check_branch
            %163 = sbr.rel (0) target = $region28
          $region27: #{forward.2} parent=23 // pred_region
            // Predicated region
            $region29: #{forward.2} parent=27 // pred_check
              _
            $region30: #{forward.2} parent=27 // pred_check_branch
              %165 = sbr.rel (0) target = $region32
            $region31: #{forward.2} parent=27 // pred_region
              loop: start=0, step=1, limit=1
              $region33: #{forward.2} parent=31 // loop_pre_header
                _
              $region34: #{forward.2} parent=31 // loop_header
                %s167 = sphi 0, %s171
                %p168 = scmp.ge.s32.totalorder %s167, 1
                %s172 = sphi %s161, %s161
                %s173 = sphi %s156, %s156
              $region35: #{forward.2} parent=31 // loop_header_branch
                %170 = sbr.rel (%p168) target = $region39
              $region36: #{forward.2} parent=31 // loop_body
                %v174 = vld [vmem:[%s172] sm:$0xff]
                %175 = vst [vmem:[%s173] sm:$0xff] %v174
                %v176 = vld [vmem:[%s172 + $0x8] sm:$0xff]
                %177 = vst [vmem:[%s173 + $0x8] sm:$0xff] %v176
                %v178 = vld [vmem:[%s172 + $0x10] sm:$0xff]
                %179 = vst [vmem:[%s173 + $0x10] sm:$0xff] %v178
                %v180 = vld [vmem:[%s172 + $0x18] sm:$0xff]
                %181 = vst [vmem:[%s173 + $0x18] sm:$0xff] %v180
                %v182 = vld [vmem:[%s172 + $0x20] sm:$0xff]
                %183 = vst [vmem:[%s173 + $0x20] sm:$0xff] %v182
                %v184 = vld [vmem:[%s172 + $0x28] sm:$0xff]
                %185 = vst [vmem:[%s173 + $0x28] sm:$0xff] %v184
                %v186 = vld [vmem:[%s172 + $0x30] sm:$0xff]
                %187 = vst [vmem:[%s173 + $0x30] sm:$0xff] %v186
                %v188 = vld [vmem:[%s172 + $0x38] sm:$0xff]
                %189 = vst [vmem:[%s173 + $0x38] sm:$0xff] %v188
                %v190 = vld [vmem:[%s172 + $0x100] sm:$0xff]
                %191 = vst [vmem:[%s173 + $0x40] sm:$0xff] %v190
                %v192 = vld [vmem:[%s172 + $0x108] sm:$0xff]
                %193 = vst [vmem:[%s173 + $0x48] sm:$0xff] %v192
                %v194 = vld [vmem:[%s172 + $0x110] sm:$0xff]
                %195 = vst [vmem:[%s173 + $0x50] sm:$0xff] %v194
                %v196 = vld [vmem:[%s172 + $0x118] sm:$0xff]
                %197 = vst [vmem:[%s173 + $0x58] sm:$0xff] %v196
                %v198 = vld [vmem:[%s172 + $0x120] sm:$0xff]
                %199 = vst [vmem:[%s173 + $0x60] sm:$0xff] %v198
                %v200 = vld [vmem:[%s172 + $0x128] sm:$0xff]
                %201 = vst [vmem:[%s173 + $0x68] sm:$0xff] %v200
                %v202 = vld [vmem:[%s172 + $0x130] sm:$0xff]
                %203 = vst [vmem:[%s173 + $0x70] sm:$0xff] %v202
                %v204 = vld [vmem:[%s172 + $0x138] sm:$0xff]
                %205 = vst [vmem:[%s173 + $0x78] sm:$0xff] %v204
              $region37: #{forward.2} parent=31 // loop_footer
                %s171 = sadd.s32 1, %s167
              $region38: #{forward.2} parent=31 // loop_footer_branch
                %166 = sbr.rel target = $region34
              $region39: #{forward.2} parent=31 // loop_exit
                _
            $region32: #{forward.2} parent=27 // pred_fallthru
              _
            // Predicated region
            $region40: #{forward.2} parent=27 // pred_check
              _
            $region41: #{forward.2} parent=27 // pred_check_branch
              %207 = sbr.rel target = $region43
            $region42: #{forward.2} parent=27 // pred_region
              _
            $region43: #{forward.2} parent=27 // pred_fallthru
              _
          $region28: #{forward.2} parent=23 // pred_fallthru
            _
          %208 = vnop
        $region24: #{forward.2} parent=19 // pred_fallthru
          _
        // Predicated region
        $region44: #{forward.2} parent=19 // pred_check
          %p209 = pneg %p96
        $region45: #{forward.2} parent=19 // pred_check_branch
          %211 = sbr.rel (%p209) target = $region47
        $region46: #{forward.2} parent=19 // pred_region
          %s212 = smul.u32 %s16, 2
          %s213 = sadd.s32 %s212, %s17
          %s214 = smul.u32 16, %s213
          %p215 = scmp.lt.s32.totalorder %s214, 63
          %s216 = scalar_select %p215, %s214, 63
          %s217 = scalar_lea.vmem %s2, %s216
          %s218 = smul.u32 %s16, 2
          %s219 = sadd.s32 %s218, %s17
          %s220 = smul.u32 16, %s219
        $region47: #{forward.2} parent=19 // pred_fallthru
          _
      $region20: #{forward.2} parent=5 // pred_fallthru
        _
      %p221 = scmp.le.s32.totalorder 1, %s9
      %p222 = scmp.lt.s32.totalorder %s9, 5
      %p223 = pnand %p221, %p222
      %p224 = pneg %p223
      // Predicated region
      $region48: #{forward.2} parent=5 // pred_check
        _
      $region49: #{forward.2} parent=5 // pred_check_branch
        %226 = sbr.rel (%p223) target = $region51
      $region50: #{forward.2} parent=5 // pred_region
        %s227 = ssub.s32 %s9, 1
        %s228 = sand.u32 %s59, 1
        %s229 = sand.u32 %s59, 1
        %s230 = smul.addr %s229, 128
        %s231 = scalar_lea.vmem [#allocation4], %s230
        // Predicated region
        $region52: #{forward.2} parent=50 // pred_check
          %p232 = pneg %p72
        $region53: #{forward.2} parent=50 // pred_check_branch
          %234 = sbr.rel (%p232) target = $region55
        $region54: #{forward.2} parent=50 // pred_region
          _
        $region55: #{forward.2} parent=50 // pred_fallthru
          _
        %p235 = pneg %p42
        %p236 = pneg %p39
        %s237 = sand.u32 %s59, 1
        %s238 = sand.u32 %s59, 1
        %s239 = smul.addr %s238, 128
        %s240 = scalar_lea.vmem [#allocation4], %s239
        %p241 = pneg %p72
        %p242 = pneg %p69
        %s243 = smul.u32 %s18, 2
        %s244 = sadd.s32 %s243, %s19
        %s245 = smul.u32 16, %s244
        %p246 = scmp.lt.s32.totalorder %s245, 63
        %s247 = scalar_select %p246, %s245, 63
        %s248 = scalar_lea.vmem %s2, %s247
        %p249 = pneg %p102
        %p250 = pneg %p99
        %p251 = pneg %p128
        %p252 = pneg %p125
        %p253 = scmp.lt.s32.totalorder %s18, 1
        %s254 = scalar_select %p253, %s18, 1
        %s255 = smul.addr %s254, 2
        %s256 = scalar_lea.vmem %s3, %s255
        %s257 = smul.u32 %s18, 2
        %s258 = sadd.s32 %s257, %s19
        %s259 = smul.u32 16, %s258
        %s260 = smul.u32 %s18, 2
        %s261 = sadd.s32 %s260, %s19
        %s262 = smul.u32 16, %s261
        %p263 = scmp.lt.s32.totalorder %s262, 63
        %s264 = scalar_select %p263, %s262, 63
        %s265 = scalar_lea.vmem %s2, %s264
        %s266 = smul.u32 %s18, 2
        %s267 = sadd.s32 %s266, %s19
        %s268 = smul.u32 16, %s267
        %p269 = scmp.lt.s32.totalorder %s18, 1
        %s270 = scalar_select %p269, %s18, 1
        %s271 = smul.addr %s270, 2
        %s272 = scalar_lea.vmem %s3, %s271
        %p274 = scmp.eq.s32.totalorder %s19, 0
        // Predicated region
        $region56: #{forward.2} parent=50 // pred_check
          %p275 = pneg %p274
        $region57: #{forward.2} parent=50 // pred_check_branch
          %277 = sbr.rel (%p275) target = $region59
        $region58: #{forward.2} parent=50 // pred_region
          %vm278 = vcmask 1024
          %279 = vst.msk [vmem:[#allocation2] sm:$0x3] %vm278, -inf
          %280 = vst.msk [vmem:[#allocation3] sm:$0x3] %vm278, 0.0
        $region59: #{forward.2} parent=50 // pred_fallthru
          _
        %v281 = vld [vmem:[%s0] sm:$0x1]
        %v282 = vld [vmem:[%s231] sm:$0xff]
        %v283 = vld [vmem:[%s231 + $0x8] sm:$0xff]
        %v284 = vld [vmem:[%s231 + $0x10] sm:$0xff]
        %v285 = vld [vmem:[%s231 + $0x18] sm:$0xff]
        %v286 = vld [vmem:[%s231 + $0x20] sm:$0xff]
        %v287 = vld [vmem:[%s231 + $0x28] sm:$0xff]
        %v288 = vld [vmem:[%s231 + $0x30] sm:$0xff]
        %v289 = vld [vmem:[%s231 + $0x38] sm:$0xff]
        %v290 = vld [vmem:[%s231 + $0x40] sm:$0xff]
        %v291 = vld [vmem:[%s231 + $0x48] sm:$0xff]
        %v292 = vld [vmem:[%s231 + $0x50] sm:$0xff]
        %v293 = vld [vmem:[%s231 + $0x58] sm:$0xff]
        %v294 = vld [vmem:[%s231 + $0x60] sm:$0xff]
        %v295 = vld [vmem:[%s231 + $0x68] sm:$0xff]
        %v296 = vld [vmem:[%s231 + $0x70] sm:$0xff]
        %v297 = vld [vmem:[%s231 + $0x78] sm:$0xff]
        %v298 = vld [vmem:[%s265] sm:$0xff]
        %v299 = vld [vmem:[%s265 + $0x8] sm:$0xff]
        %v302 = vlaneseq
        %v303 = vshrl.u32 %v302, 7
        %v304 = vsub.s32 0, %v303
        %v305 = vrot.slane %v298, %v304
        %v306 = vlaneseq
        %v307 = vshrl.u32 %v306, 7
        %v308 = vsub.s32 1, %v307
        %v309 = vrot.slane %v298, %v308
        %v310 = vlaneseq
        %v311 = vshrl.u32 %v310, 7
        %v312 = vsub.s32 2, %v311
        %v313 = vrot.slane %v298, %v312
        %v314 = vlaneseq
        %v315 = vshrl.u32 %v314, 7
        %v316 = vsub.s32 3, %v315
        %v317 = vrot.slane %v298, %v316
        %v318 = vlaneseq
        %v319 = vshrl.u32 %v318, 7
        %v320 = vsub.s32 4, %v319
        %v321 = vrot.slane %v298, %v320
        %v322 = vlaneseq
        %v323 = vshrl.u32 %v322, 7
        %v324 = vsub.s32 5, %v323
        %v325 = vrot.slane %v298, %v324
        %v326 = vlaneseq
        %v327 = vshrl.u32 %v326, 7
        %v328 = vsub.s32 6, %v327
        %v329 = vrot.slane %v298, %v328
        %v330 = vlaneseq
        %v331 = vshrl.u32 %v330, 7
        %v332 = vsub.s32 7, %v331
        %v333 = vrot.slane %v298, %v332
        %v334 = vlaneseq
        %v335 = vshrl.u32 %v334, 7
        %v336 = vsub.s32 0, %v335
        %v337 = vrot.slane %v299, %v336
        %v338 = vlaneseq
        %v339 = vshrl.u32 %v338, 7
        %v340 = vsub.s32 1, %v339
        %v341 = vrot.slane %v299, %v340
        %v342 = vlaneseq
        %v343 = vshrl.u32 %v342, 7
        %v344 = vsub.s32 2, %v343
        %v345 = vrot.slane %v299, %v344
        %v346 = vlaneseq
        %v347 = vshrl.u32 %v346, 7
        %v348 = vsub.s32 3, %v347
        %v349 = vrot.slane %v299, %v348
        %v350 = vlaneseq
        %v351 = vshrl.u32 %v350, 7
        %v352 = vsub.s32 4, %v351
        %v353 = vrot.slane %v299, %v352
        %v354 = vlaneseq
        %v355 = vshrl.u32 %v354, 7
        %v356 = vsub.s32 5, %v355
        %v357 = vrot.slane %v299, %v356
        %v358 = vlaneseq
        %v359 = vshrl.u32 %v358, 7
        %v360 = vsub.s32 6, %v359
        %v361 = vrot.slane %v299, %v360
        %v362 = vlaneseq
        %v363 = vshrl.u32 %v362, 7
        %v364 = vsub.s32 7, %v363
        %v365 = vrot.slane %v299, %v364
        %v398 = vunpack.c.l.b16 %v282
        %v399 = vunpack.c.h.b16 %v282
        %v400 = vunpack.c.l.b16 %v283
        %v401 = vunpack.c.h.b16 %v283
        %v402 = vunpack.c.l.b16 %v284
        %v403 = vunpack.c.h.b16 %v284
        %v404 = vunpack.c.l.b16 %v285
        %v405 = vunpack.c.h.b16 %v285
        %v406 = vunpack.c.l.b16 %v286
        %v407 = vunpack.c.h.b16 %v286
        %v408 = vunpack.c.l.b16 %v287
        %v409 = vunpack.c.h.b16 %v287
        %v410 = vunpack.c.l.b16 %v288
        %v411 = vunpack.c.h.b16 %v288
        %v412 = vunpack.c.l.b16 %v289
        %v413 = vunpack.c.h.b16 %v289
        %v414 = vunpack.c.l.b16 %v290
        %v415 = vunpack.c.h.b16 %v290
        %v416 = vunpack.c.l.b16 %v291
        %v417 = vunpack.c.h.b16 %v291
        %v418 = vunpack.c.l.b16 %v292
        %v419 = vunpack.c.h.b16 %v292
        %v420 = vunpack.c.l.b16 %v293
        %v421 = vunpack.c.h.b16 %v293
        %v422 = vunpack.c.l.b16 %v294
        %v423 = vunpack.c.h.b16 %v294
        %v424 = vunpack.c.l.b16 %v295
        %v425 = vunpack.c.h.b16 %v295
        %v426 = vunpack.c.l.b16 %v296
        %v427 = vunpack.c.h.b16 %v296
        %v428 = vunpack.c.l.b16 %v297
        %v429 = vunpack.c.h.b16 %v297
        %v430 = vpack.c.b16 %v414, %v398
        %v431 = vpack.c.b16 %v415, %v399
        %v432 = vpack.c.b16 %v416, %v400
        %v433 = vpack.c.b16 %v417, %v401
        %v434 = vpack.c.b16 %v418, %v402
        %v435 = vpack.c.b16 %v419, %v403
        %v436 = vpack.c.b16 %v420, %v404
        %v437 = vpack.c.b16 %v421, %v405
        %v438 = vpack.c.b16 %v422, %v406
        %v439 = vpack.c.b16 %v423, %v407
        %v440 = vpack.c.b16 %v424, %v408
        %v441 = vpack.c.b16 %v425, %v409
        %v442 = vpack.c.b16 %v426, %v410
        %v443 = vpack.c.b16 %v427, %v411
        %v444 = vpack.c.b16 %v428, %v412
        %v445 = vpack.c.b16 %v429, %v413
        %vm462 = vcmask 130048
        %v464 = vsel %vm462, %v281, 0
        %466 = vmatprep.subr.bf16.mxu0 %v431
        %467 = vmatpush1.bf16.msra.mxu0 %v430
        %468 = vmatprep.subr.bf16.mxu0 0
        %469 = vmatpush1.bf16.msra.mxu0 0
        %470 = vmatprep.subr.bf16.mxu0 0
        %471 = vmatpush1.bf16.msra.mxu0 0
        %472 = vmatprep.subr.bf16.mxu0 0
        %473 = vmatpush1.bf16.msra.mxu0 0
        %474 = vmatprep.subr.bf16.mxu0 0
        %475 = vmatpush1.bf16.msra.mxu0 0
        %476 = vmatprep.subr.bf16.mxu0 0
        %477 = vmatpush1.bf16.msra.mxu0 0
        %478 = vmatprep.subr.bf16.mxu0 0
        %479 = vmatpush1.bf16.msra.mxu0 0
        %480 = vmatprep.subr.bf16.mxu0 0
        %481 = vmatpush1.bf16.msra.mxu0 0
        %482 = vmatprep.subr.bf16.mxu0 0
        %483 = vmatpush1.bf16.msra.mxu0 0
        %484 = vmatprep.subr.bf16.mxu0 0
        %485 = vmatpush1.bf16.msra.mxu0 0
        %486 = vmatprep.subr.bf16.mxu0 0
        %487 = vmatpush1.bf16.msra.mxu0 0
        %488 = vmatprep.subr.bf16.mxu0 0
        %489 = vmatpush1.bf16.msra.mxu0 0
        %490 = vmatprep.subr.bf16.mxu0 0
        %491 = vmatpush1.bf16.msra.mxu0 0
        %492 = vmatprep.subr.bf16.mxu0 0
        %493 = vmatpush1.bf16.msra.mxu0 0
        %494 = vmatprep.subr.bf16.mxu0 0
        %495 = vmatpush1.bf16.msra.mxu0 0
        %496 = vmatprep.subr.bf16.mxu0 0
        %497 = vmatpush1.bf16.msra.mxu0 0
        %498 = vmatprep.mubr.bf16.mxu0 0
        %499 = vmatmul.mubr.bf16.gmra.mrb[0].mxu0 %v464
        %v500 = vpop.f32.mrb[0].mxu0
        %v501 = vadd.f32 %v305, %v500
        %v502 = vpop.f32.mrb[0].mxu0
        %v503 = vadd.f32 %v309, %v502
        %v504 = vpop.f32.mrb[0].mxu0
        %v505 = vpop.f32.mrb[0].mxu0
        %506 = vdwg.mxu0
        %507 = vmatprep.subr.bf16.mxu0 %v433
        %508 = vmatpush1.bf16.msra.mxu0 %v432
        %509 = vmatprep.subr.bf16.mxu0 0
        %510 = vmatpush1.bf16.msra.mxu0 0
        %511 = vmatprep.subr.bf16.mxu0 0
        %512 = vmatpush1.bf16.msra.mxu0 0
        %513 = vmatprep.subr.bf16.mxu0 0
        %514 = vmatpush1.bf16.msra.mxu0 0
        %515 = vmatprep.subr.bf16.mxu0 0
        %516 = vmatpush1.bf16.msra.mxu0 0
        %517 = vmatprep.subr.bf16.mxu0 0
        %518 = vmatpush1.bf16.msra.mxu0 0
        %519 = vmatprep.subr.bf16.mxu0 0
        %520 = vmatpush1.bf16.msra.mxu0 0
        %521 = vmatprep.subr.bf16.mxu0 0
        %522 = vmatpush1.bf16.msra.mxu0 0
        %523 = vmatprep.subr.bf16.mxu0 0
        %524 = vmatpush1.bf16.msra.mxu0 0
        %525 = vmatprep.subr.bf16.mxu0 0
        %526 = vmatpush1.bf16.msra.mxu0 0
        %527 = vmatprep.subr.bf16.mxu0 0
        %528 = vmatpush1.bf16.msra.mxu0 0
        %529 = vmatprep.subr.bf16.mxu0 0
        %530 = vmatpush1.bf16.msra.mxu0 0
        %531 = vmatprep.subr.bf16.mxu0 0
        %532 = vmatpush1.bf16.msra.mxu0 0
        %533 = vmatprep.subr.bf16.mxu0 0
        %534 = vmatpush1.bf16.msra.mxu0 0
        %535 = vmatprep.subr.bf16.mxu0 0
        %536 = vmatpush1.bf16.msra.mxu0 0
        %537 = vmatprep.subr.bf16.mxu0 0
        %538 = vmatpush1.bf16.msra.mxu0 0
        %539 = vmatprep.mubr.bf16.mxu0 0
        %540 = vmatmul.mubr.bf16.gmra.mrb[0].mxu0 %v464
        %v541 = vpop.f32.mrb[0].mxu0
        %v542 = vadd.f32 %v313, %v541
        %v543 = vpop.f32.mrb[0].mxu0
        %v544 = vadd.f32 %v317, %v543
        %v545 = vpop.f32.mrb[0].mxu0
        %v546 = vpop.f32.mrb[0].mxu0
        %547 = vdwg.mxu0
        %548 = vmatprep.subr.bf16.mxu0 %v435
        %549 = vmatpush1.bf16.msra.mxu0 %v434
        %550 = vmatprep.subr.bf16.mxu0 0
        %551 = vmatpush1.bf16.msra.mxu0 0
        %552 = vmatprep.subr.bf16.mxu0 0
        %553 = vmatpush1.bf16.msra.mxu0 0
        %554 = vmatprep.subr.bf16.mxu0 0
        %555 = vmatpush1.bf16.msra.mxu0 0
        %556 = vmatprep.subr.bf16.mxu0 0
        %557 = vmatpush1.bf16.msra.mxu0 0
        %558 = vmatprep.subr.bf16.mxu0 0
        %559 = vmatpush1.bf16.msra.mxu0 0
        %560 = vmatprep.subr.bf16.mxu0 0
        %561 = vmatpush1.bf16.msra.mxu0 0
        %562 = vmatprep.subr.bf16.mxu0 0
        %563 = vmatpush1.bf16.msra.mxu0 0
        %564 = vmatprep.subr.bf16.mxu0 0
        %565 = vmatpush1.bf16.msra.mxu0 0
        %566 = vmatprep.subr.bf16.mxu0 0
        %567 = vmatpush1.bf16.msra.mxu0 0
        %568 = vmatprep.subr.bf16.mxu0 0
        %569 = vmatpush1.bf16.msra.mxu0 0
        %570 = vmatprep.subr.bf16.mxu0 0
        %571 = vmatpush1.bf16.msra.mxu0 0
        %572 = vmatprep.subr.bf16.mxu0 0
        %573 = vmatpush1.bf16.msra.mxu0 0
        %574 = vmatprep.subr.bf16.mxu0 0
        %575 = vmatpush1.bf16.msra.mxu0 0
        %576 = vmatprep.subr.bf16.mxu0 0
        %577 = vmatpush1.bf16.msra.mxu0 0
        %578 = vmatprep.subr.bf16.mxu0 0
        %579 = vmatpush1.bf16.msra.mxu0 0
        %580 = vmatprep.mubr.bf16.mxu0 0
        %581 = vmatmul.mubr.bf16.gmra.mrb[0].mxu0 %v464
        %v582 = vpop.f32.mrb[0].mxu0
        %v583 = vadd.f32 %v321, %v582
        %v584 = vpop.f32.mrb[0].mxu0
        %v585 = vadd.f32 %v325, %v584
        %v586 = vpop.f32.mrb[0].mxu0
        %v587 = vpop.f32.mrb[0].mxu0
        %588 = vdwg.mxu0
        %589 = vmatprep.subr.bf16.mxu0 %v437
        %590 = vmatpush1.bf16.msra.mxu0 %v436
        %591 = vmatprep.subr.bf16.mxu0 0
        %592 = vmatpush1.bf16.msra.mxu0 0
        %593 = vmatprep.subr.bf16.mxu0 0
        %594 = vmatpush1.bf16.msra.mxu0 0
        %595 = vmatprep.subr.bf16.mxu0 0
        %596 = vmatpush1.bf16.msra.mxu0 0
        %597 = vmatprep.subr.bf16.mxu0 0
        %598 = vmatpush1.bf16.msra.mxu0 0
        %599 = vmatprep.subr.bf16.mxu0 0
        %600 = vmatpush1.bf16.msra.mxu0 0
        %601 = vmatprep.subr.bf16.mxu0 0
        %602 = vmatpush1.bf16.msra.mxu0 0
        %603 = vmatprep.subr.bf16.mxu0 0
        %604 = vmatpush1.bf16.msra.mxu0 0
        %605 = vmatprep.subr.bf16.mxu0 0
        %606 = vmatpush1.bf16.msra.mxu0 0
        %607 = vmatprep.subr.bf16.mxu0 0
        %608 = vmatpush1.bf16.msra.mxu0 0
        %609 = vmatprep.subr.bf16.mxu0 0
        %610 = vmatpush1.bf16.msra.mxu0 0
        %611 = vmatprep.subr.bf16.mxu0 0
        %612 = vmatpush1.bf16.msra.mxu0 0
        %613 = vmatprep.subr.bf16.mxu0 0
        %614 = vmatpush1.bf16.msra.mxu0 0
        %615 = vmatprep.subr.bf16.mxu0 0
        %616 = vmatpush1.bf16.msra.mxu0 0
        %617 = vmatprep.subr.bf16.mxu0 0
        %618 = vmatpush1.bf16.msra.mxu0 0
        %619 = vmatprep.subr.bf16.mxu0 0
        %620 = vmatpush1.bf16.msra.mxu0 0
        %621 = vmatprep.mubr.bf16.mxu0 0
        %622 = vmatmul.mubr.bf16.gmra.mrb[0].mxu0 %v464
        %v623 = vpop.f32.mrb[0].mxu0
        %v624 = vadd.f32 %v329, %v623
        %v625 = vpop.f32.mrb[0].mxu0
        %v626 = vadd.f32 %v333, %v625
        %v627 = vpop.f32.mrb[0].mxu0
        %v628 = vpop.f32.mrb[0].mxu0
        %629 = vdwg.mxu0
        %630 = vmatprep.subr.bf16.mxu0 %v439
        %631 = vmatpush1.bf16.msra.mxu0 %v438
        %632 = vmatprep.subr.bf16.mxu0 0
        %633 = vmatpush1.bf16.msra.mxu0 0
        %634 = vmatprep.subr.bf16.mxu0 0
        %635 = vmatpush1.bf16.msra.mxu0 0
        %636 = vmatprep.subr.bf16.mxu0 0
        %637 = vmatpush1.bf16.msra.mxu0 0
        %638 = vmatprep.subr.bf16.mxu0 0
        %639 = vmatpush1.bf16.msra.mxu0 0
        %640 = vmatprep.subr.bf16.mxu0 0
        %641 = vmatpush1.bf16.msra.mxu0 0
        %642 = vmatprep.subr.bf16.mxu0 0
        %643 = vmatpush1.bf16.msra.mxu0 0
        %644 = vmatprep.subr.bf16.mxu0 0
        %645 = vmatpush1.bf16.msra.mxu0 0
        %646 = vmatprep.subr.bf16.mxu0 0
        %647 = vmatpush1.bf16.msra.mxu0 0
        %648 = vmatprep.subr.bf16.mxu0 0
        %649 = vmatpush1.bf16.msra.mxu0 0
        %650 = vmatprep.subr.bf16.mxu0 0
        %651 = vmatpush1.bf16.msra.mxu0 0
        %652 = vmatprep.subr.bf16.mxu0 0
        %653 = vmatpush1.bf16.msra.mxu0 0
        %654 = vmatprep.subr.bf16.mxu0 0
        %655 = vmatpush1.bf16.msra.mxu0 0
        %656 = vmatprep.subr.bf16.mxu0 0
        %657 = vmatpush1.bf16.msra.mxu0 0
        %658 = vmatprep.subr.bf16.mxu0 0
        %659 = vmatpush1.bf16.msra.mxu0 0
        %660 = vmatprep.subr.bf16.mxu0 0
        %661 = vmatpush1.bf16.msra.mxu0 0
        %662 = vmatprep.mubr.bf16.mxu0 0
        %663 = vmatmul.mubr.bf16.gmra.mrb[0].mxu0 %v464
        %v664 = vpop.f32.mrb[0].mxu0
        %v665 = vadd.f32 %v337, %v664
        %v666 = vpop.f32.mrb[0].mxu0
        %v667 = vadd.f32 %v341, %v666
        %v668 = vpop.f32.mrb[0].mxu0
        %v669 = vpop.f32.mrb[0].mxu0
        %670 = vdwg.mxu0
        %671 = vmatprep.subr.bf16.mxu0 %v441
        %672 = vmatpush1.bf16.msra.mxu0 %v440
        %673 = vmatprep.subr.bf16.mxu0 0
        %674 = vmatpush1.bf16.msra.mxu0 0
        %675 = vmatprep.subr.bf16.mxu0 0
        %676 = vmatpush1.bf16.msra.mxu0 0
        %677 = vmatprep.subr.bf16.mxu0 0
        %678 = vmatpush1.bf16.msra.mxu0 0
        %679 = vmatprep.subr.bf16.mxu0 0
        %680 = vmatpush1.bf16.msra.mxu0 0
        %681 = vmatprep.subr.bf16.mxu0 0
        %682 = vmatpush1.bf16.msra.mxu0 0
        %683 = vmatprep.subr.bf16.mxu0 0
        %684 = vmatpush1.bf16.msra.mxu0 0
        %685 = vmatprep.subr.bf16.mxu0 0
        %686 = vmatpush1.bf16.msra.mxu0 0
        %687 = vmatprep.subr.bf16.mxu0 0
        %688 = vmatpush1.bf16.msra.mxu0 0
        %689 = vmatprep.subr.bf16.mxu0 0
        %690 = vmatpush1.bf16.msra.mxu0 0
        %691 = vmatprep.subr.bf16.mxu0 0
        %692 = vmatpush1.bf16.msra.mxu0 0
        %693 = vmatprep.subr.bf16.mxu0 0
        %694 = vmatpush1.bf16.msra.mxu0 0
        %695 = vmatprep.subr.bf16.mxu0 0
        %696 = vmatpush1.bf16.msra.mxu0 0
        %697 = vmatprep.subr.bf16.mxu0 0
        %698 = vmatpush1.bf16.msra.mxu0 0
        %699 = vmatprep.subr.bf16.mxu0 0
        %700 = vmatpush1.bf16.msra.mxu0 0
        %701 = vmatprep.subr.bf16.mxu0 0
        %702 = vmatpush1.bf16.msra.mxu0 0
        %703 = vmatprep.mubr.bf16.mxu0 0
        %704 = vmatmul.mubr.bf16.gmra.mrb[0].mxu0 %v464
        %v705 = vpop.f32.mrb[0].mxu0
        %v706 = vadd.f32 %v345, %v705
        %v707 = vpop.f32.mrb[0].mxu0
        %v708 = vadd.f32 %v349, %v707
        %v709 = vpop.f32.mrb[0].mxu0
        %v710 = vpop.f32.mrb[0].mxu0
        %711 = vdwg.mxu0
        %712 = vmatprep.subr.bf16.mxu0 %v443
        %713 = vmatpush1.bf16.msra.mxu0 %v442
        %714 = vmatprep.subr.bf16.mxu0 0
        %715 = vmatpush1.bf16.msra.mxu0 0
        %716 = vmatprep.subr.bf16.mxu0 0
        %717 = vmatpush1.bf16.msra.mxu0 0
        %718 = vmatprep.subr.bf16.mxu0 0
        %719 = vmatpush1.bf16.msra.mxu0 0
        %720 = vmatprep.subr.bf16.mxu0 0
        %721 = vmatpush1.bf16.msra.mxu0 0
        %722 = vmatprep.subr.bf16.mxu0 0
        %723 = vmatpush1.bf16.msra.mxu0 0
        %724 = vmatprep.subr.bf16.mxu0 0
        %725 = vmatpush1.bf16.msra.mxu0 0
        %726 = vmatprep.subr.bf16.mxu0 0
        %727 = vmatpush1.bf16.msra.mxu0 0
        %728 = vmatprep.subr.bf16.mxu0 0
        %729 = vmatpush1.bf16.msra.mxu0 0
        %730 = vmatprep.subr.bf16.mxu0 0
        %731 = vmatpush1.bf16.msra.mxu0 0
        %732 = vmatprep.subr.bf16.mxu0 0
        %733 = vmatpush1.bf16.msra.mxu0 0
        %734 = vmatprep.subr.bf16.mxu0 0
        %735 = vmatpush1.bf16.msra.mxu0 0
        %736 = vmatprep.subr.bf16.mxu0 0
        %737 = vmatpush1.bf16.msra.mxu0 0
        %738 = vmatprep.subr.bf16.mxu0 0
        %739 = vmatpush1.bf16.msra.mxu0 0
        %740 = vmatprep.subr.bf16.mxu0 0
        %741 = vmatpush1.bf16.msra.mxu0 0
        %742 = vmatprep.subr.bf16.mxu0 0
        %743 = vmatpush1.bf16.msra.mxu0 0
        %744 = vmatprep.mubr.bf16.mxu0 0
        %745 = vmatmul.mubr.bf16.gmra.mrb[0].mxu0 %v464
        %v746 = vpop.f32.mrb[0].mxu0
        %v747 = vadd.f32 %v353, %v746
        %v748 = vpop.f32.mrb[0].mxu0
        %v749 = vadd.f32 %v357, %v748
        %v750 = vpop.f32.mrb[0].mxu0
        %v751 = vpop.f32.mrb[0].mxu0
        %752 = vdwg.mxu0
        %753 = vmatprep.subr.bf16.mxu0 %v445
        %754 = vmatpush1.bf16.msra.mxu0 %v444
        %755 = vmatprep.subr.bf16.mxu0 0
        %756 = vmatpush1.bf16.msra.mxu0 0
        %757 = vmatprep.subr.bf16.mxu0 0
        %758 = vmatpush1.bf16.msra.mxu0 0
        %759 = vmatprep.subr.bf16.mxu0 0
        %760 = vmatpush1.bf16.msra.mxu0 0
        %761 = vmatprep.subr.bf16.mxu0 0
        %762 = vmatpush1.bf16.msra.mxu0 0
        %763 = vmatprep.subr.bf16.mxu0 0
        %764 = vmatpush1.bf16.msra.mxu0 0
        %765 = vmatprep.subr.bf16.mxu0 0
        %766 = vmatpush1.bf16.msra.mxu0 0
        %767 = vmatprep.subr.bf16.mxu0 0
        %768 = vmatpush1.bf16.msra.mxu0 0
        %769 = vmatprep.subr.bf16.mxu0 0
        %770 = vmatpush1.bf16.msra.mxu0 0
        %771 = vmatprep.subr.bf16.mxu0 0
        %772 = vmatpush1.bf16.msra.mxu0 0
        %773 = vmatprep.subr.bf16.mxu0 0
        %774 = vmatpush1.bf16.msra.mxu0 0
        %775 = vmatprep.subr.bf16.mxu0 0
        %776 = vmatpush1.bf16.msra.mxu0 0
        %777 = vmatprep.subr.bf16.mxu0 0
        %778 = vmatpush1.bf16.msra.mxu0 0
        %779 = vmatprep.subr.bf16.mxu0 0
        %780 = vmatpush1.bf16.msra.mxu0 0
        %781 = vmatprep.subr.bf16.mxu0 0
        %782 = vmatpush1.bf16.msra.mxu0 0
        %783 = vmatprep.subr.bf16.mxu0 0
        %784 = vmatpush1.bf16.msra.mxu0 0
        %785 = vmatprep.mubr.bf16.mxu0 0
        %786 = vmatmul.mubr.bf16.gmra.mrb[0].mxu0 %v464
        %v787 = vpop.f32.mrb[0].mxu0
        %v788 = vadd.f32 %v361, %v787
        %v789 = vpop.f32.mrb[0].mxu0
        %v790 = vadd.f32 %v365, %v789
        %v791 = vpop.f32.mrb[0].mxu0
        %v792 = vpop.f32.mrb[0].mxu0
        %793 = vdwg.mxu0
        %v794 = vld [vmem:[#allocation2] sm:$0x3]
        %vm795 = vcmask 1041408
        %v796 = vsel %vm795, %v501, -inf
        %v797 = vsel %vm795, %v503, -inf
        %v798 = vsel %vm795, %v542, -inf
        %v799 = vsel %vm795, %v544, -inf
        %v800 = vsel %vm795, %v583, -inf
        %v801 = vmax.f32 %v796, %v800
        %v802 = vsel %vm795, %v585, -inf
        %v803 = vmax.f32 %v797, %v802
        %v804 = vsel %vm795, %v624, -inf
        %v805 = vmax.f32 %v798, %v804
        %v806 = vsel %vm795, %v626, -inf
        %v807 = vmax.f32 %v799, %v806
        %v808 = vsel %vm795, %v665, -inf
        %v809 = vmax.f32 %v801, %v808
        %v810 = vsel %vm795, %v667, -inf
        %v811 = vmax.f32 %v803, %v810
        %v812 = vsel %vm795, %v706, -inf
        %v813 = vmax.f32 %v805, %v812
        %v814 = vsel %vm795, %v708, -inf
        %v815 = vmax.f32 %v807, %v814
        %v816 = vsel %vm795, %v747, -inf
        %v817 = vmax.f32 %v809, %v816
        %v818 = vsel %vm795, %v749, -inf
        %v819 = vmax.f32 %v811, %v818
        %v820 = vsel %vm795, %v788, -inf
        %v821 = vmax.f32 %v813, %v820
        %v822 = vsel %vm795, %v790, -inf
        %v823 = vmax.f32 %v815, %v822
        %v824 = vmax.f32 %v817, %v819
        %v825 = vmax.f32 %v821, %v823
        %v826 = vmax.f32 %v824, %v825
        %827 = vmax.xlane.f32.xlu0 %v826
        %v828 = vpop.xlane.xlu0 %827
        %v829 = vmax.f32 %v794, %v828
        %v830 = vld [vmem:[#allocation3] sm:$0x3]
        %v831 = vsub.f32 %v794, %v829
        %v832 = vmul.f32 %v831, 1.442695
        %v833 = vpow.pop %v832
        %v834 = vmul.f32 %v830, %v833
        %836 = vset.pattern.permute.xlu0 0
        %837 = vperm.xlu0 %836, %v829
        %v838 = vpop.permute.xlu0 %837
        %v840 = vsub.f32 %v501, %v838
        %v841 = vsub.f32 %v503, %v838
        %v842 = vsub.f32 %v542, %v838
        %v843 = vsub.f32 %v544, %v838
        %v844 = vsub.f32 %v583, %v838
        %v845 = vsub.f32 %v585, %v838
        %v846 = vsub.f32 %v624, %v838
        %v847 = vsub.f32 %v626, %v838
        %v848 = vsub.f32 %v665, %v838
        %v849 = vsub.f32 %v667, %v838
        %v850 = vsub.f32 %v706, %v838
        %v851 = vsub.f32 %v708, %v838
        %v852 = vsub.f32 %v747, %v838
        %v853 = vsub.f32 %v749, %v838
        %v854 = vsub.f32 %v788, %v838
        %v855 = vsub.f32 %v790, %v838
        %v856 = vmul.f32 %v840, 1.442695
        %v857 = vpow.pop %v856
        %v858 = vmul.f32 %v841, 1.442695
        %v859 = vpow.pop %v858
        %v860 = vmul.f32 %v842, 1.442695
        %v861 = vpow.pop %v860
        %v862 = vmul.f32 %v843, 1.442695
        %v863 = vpow.pop %v862
        %v864 = vmul.f32 %v844, 1.442695
        %v865 = vpow.pop %v864
        %v866 = vmul.f32 %v845, 1.442695
        %v867 = vpow.pop %v866
        %v868 = vmul.f32 %v846, 1.442695
        %v869 = vpow.pop %v868
        %v870 = vmul.f32 %v847, 1.442695
        %v871 = vpow.pop %v870
        %v872 = vmul.f32 %v848, 1.442695
        %v873 = vpow.pop %v872
        %v874 = vmul.f32 %v849, 1.442695
        %v875 = vpow.pop %v874
        %v876 = vmul.f32 %v850, 1.442695
        %v877 = vpow.pop %v876
        %v878 = vmul.f32 %v851, 1.442695
        %v879 = vpow.pop %v878
        %v880 = vmul.f32 %v852, 1.442695
        %v881 = vpow.pop %v880
        %v882 = vmul.f32 %v853, 1.442695
        %v883 = vpow.pop %v882
        %v884 = vmul.f32 %v854, 1.442695
        %v885 = vpow.pop %v884
        %v886 = vmul.f32 %v855, 1.442695
        %v887 = vpow.pop %v886
        %v888 = vsel %vm795, %v857, 0.0
        %v889 = vsel %vm795, %v859, 0.0
        %v890 = vadd.f32 %v888, %v889
        %v891 = vsel %vm795, %v861, 0.0
        %v892 = vadd.f32 %v890, %v891
        %v893 = vsel %vm795, %v863, 0.0
        %v894 = vadd.f32 %v892, %v893
        %v895 = vsel %vm795, %v865, 0.0
        %v896 = vadd.f32 %v894, %v895
        %v897 = vsel %vm795, %v867, 0.0
        %v898 = vadd.f32 %v896, %v897
        %v899 = vsel %vm795, %v869, 0.0
        %v900 = vadd.f32 %v898, %v899
        %v901 = vsel %vm795, %v871, 0.0
        %v902 = vadd.f32 %v900, %v901
        %v903 = vsel %vm795, %v873, 0.0
        %v904 = vadd.f32 %v902, %v903
        %v905 = vsel %vm795, %v875, 0.0
        %v906 = vadd.f32 %v904, %v905
        %v907 = vsel %vm795, %v877, 0.0
        %v908 = vadd.f32 %v906, %v907
        %v909 = vsel %vm795, %v879, 0.0
        %v910 = vadd.f32 %v908, %v909
        %v911 = vsel %vm795, %v881, 0.0
        %v912 = vadd.f32 %v910, %v911
        %v913 = vsel %vm795, %v883, 0.0
        %v914 = vadd.f32 %v912, %v913
        %v915 = vsel %vm795, %v885, 0.0
        %v916 = vadd.f32 %v914, %v915
        %v917 = vsel %vm795, %v887, 0.0
        %v918 = vadd.f32 %v916, %v917
        %919 = vadd.xlane.f32.xlu0 %v918
        %v920 = vpop.xlane.xlu0 %919
        %v921 = vadd.f32 %v834, %v920
        %vm922 = vcmask 1024
        %923 = vst.msk [vmem:[#allocation3] sm:$0x3] %vm922, %v921
        %924 = vst.msk [vmem:[#allocation2] sm:$0x3] %vm922, %v829
        %p925 = scmp.eq.s32.totalorder %s19, 1
        // Predicated region
        $region60: #{forward.2} parent=50 // pred_check
          %p926 = pneg %p925
        $region61: #{forward.2} parent=50 // pred_check_branch
          %928 = sbr.rel (%p926) target = $region63
        $region62: #{forward.2} parent=50 // pred_region
          %v929 = vld [vmem:[#allocation2] sm:$0x3]
          %v930 = vld [vmem:[#allocation3] sm:$0x3]
          %v931 = vlog2.pop %v930
          %v932 = vmul.f32 %v931, 0.6931472
          %v933 = vadd.f32 %v929, %v932
          %934 = vst.msk [vmem:[%s272] sm:$0x3] %vm922, %v933
        $region63: #{forward.2} parent=50 // pred_fallthru
          _
        %p935 = scmp.lt.s32.totalorder %s18, 1
        %s936 = scalar_select %p935, %s18, 1
        %s937 = smul.addr %s936, 2
        %s938 = scalar_lea.vmem %s3, %s937
        // Predicated region
        $region64: #{forward.2} parent=50 // pred_check
          %p939 = pneg %p125
        $region65: #{forward.2} parent=50 // pred_check_branch
          %941 = sbr.rel (%p939) target = $region67
        $region66: #{forward.2} parent=50 // pred_region
          _
        $region67: #{forward.2} parent=50 // pred_fallthru
          _
      $region51: #{forward.2} parent=5 // pred_fallthru
        _
      %p942 = scmp.le.s32.totalorder 2, %s9
      // Predicated region
      $region68: #{forward.2} parent=5 // pred_check
        %p943 = pneg %p942
      $region69: #{forward.2} parent=5 // pred_check_branch
        %945 = sbr.rel (%p943) target = $region71
      $region70: #{forward.2} parent=5 // pred_region
        %s946 = ssub.s32 %s9, 2
        // Predicated region
        $region72: #{forward.2} parent=70 // pred_check
          %p947 = pneg %p131
        $region73: #{forward.2} parent=70 // pred_check_branch
          %949 = sbr.rel (%p947) target = $region75
        $region74: #{forward.2} parent=70 // pred_region
          %p950 = scmp.lt.s32.totalorder %s20, 1
          %s951 = scalar_select %p950, %s20, 1
          %s952 = smul.addr %s951, 2
          %s953 = scalar_lea.vmem %s3, %s952
        $region75: #{forward.2} parent=70 // pred_fallthru
          _
      $region71: #{forward.2} parent=5 // pred_fallthru
        _
    $region6: #{forward.2} parent=1 // loop_footer
      %s13 = sadd.s32 1, %s9
    $region7: #{forward.2} parent=1 // loop_footer_branch
      %8 = sbr.rel target = $region3
    $region8: #{forward.2} parent=1 // loop_exit
      _

// kernel: forward.3
$region0: #{forward.3}
  #allocation0 [shape = 'u32[]', space=smem, size = 0x4, offset = 0x4, fixed_abs, tag = 'smem constant byte address 0x4 - core index']
  #allocation1 [shape = 'u32[144,128]{1,0:T(1,128)}', space=vmem, size = 0x12000, scoped, tag = 'internal scratch']
  %s0 = inlined_call_operand.vmem [shape: bf16[2,16], index: 0, kind: input, shape index: {}]
  %s1 = inlined_call_operand.vmem [shape: bf16[16,8192], index: 1, kind: input, shape index: {}]
  %s2 = inlined_call_operand.vmem [shape: f32[1,8192], index: 2, kind: input, shape index: {}]
  %s3 = inlined_call_operand.vmem [shape: f32[2,1], index: 3, kind: input, shape index: {}]
  %s4 = inlined_call_operand.vmem [shape: f32[16,8192], index: 4, kind: output, shape index: {}]
  %s5 = sld [smem:[#allocation0]]
  $region91: #{forward.3} parent=0
    _
  %s7 = ssub.s32 1, %s5
  %s8 = scalar_select 0, %s7, %s5
  $region1: #{forward.3} parent=0
    #allocation2 [shape = 'u8[131072]{0}', space=vmem, size = 0x20000, scoped, tag = 'input window, operand 1']
    #allocation3 [shape = 'u8[262144]{0}', space=vmem, size = 0x40000, scoped, tag = 'output window, operand 0']
    loop: start=0, step=1, limit=6
    $region2: #{forward.3} parent=1 // loop_pre_header
      _
    $region3: #{forward.3} parent=1 // loop_header
      %s10 = sphi 0, %s14
      %p11 = scmp.ge.s32.totalorder %s10, 6
      %s17 = sphi 0, %s29
      %s18 = sphi 0, %s25
      %s19 = sphi 0, %s17
      %s20 = sphi 0, %s18
      %s21 = sphi 0, %s19
      %s22 = sphi 0, %s20
      %s30 = sphi 0, %s30
      %s32 = sphi 0, %s30
      %s33 = sphi 0, %s32
      %s47 = sphi 0, %s33
      %s53 = sphi 0, %s55
      %s56 = sphi 0, %s53
      %s57 = sphi 0, %s56
      %s73 = sphi 0, %s57
      %s79 = sphi 0, %s81
      %s82 = sphi 0, %s79
      %s83 = sphi 0, %s82
      %s99 = sphi 0, %s83
      %s103 = sphi 0, %s103
      %s105 = sphi 0, %s103
      %s106 = sphi 0, %s105
      %s120 = sphi 0, %s106
      %s128 = sphi 0, %s130
      %s131 = sphi 0, %s128
      %s132 = sphi 0, %s131
      %s148 = sphi 0, %s132
    $region4: #{forward.3} parent=1 // loop_header_branch
      %13 = sbr.rel (%p11) target = $region8
    $region5: #{forward.3} parent=1 // loop_body
      %s15 = ssub.s32 %s10, 1
      %s16 = ssub.s32 %s10, 2
      %s23 = sadd.s32 1, %s18
      %p24 = scmp.ge.s32.totalorder %s23, 4
      %s25 = scalar_select %p24, 0, %s23
      %s26 = sadd.s32 1, %s17
      %s27 = scalar_select %p24, %s26, %s17
      %p28 = scmp.ge.s32.totalorder %s27, 1
      %s29 = scalar_select %p28, 0, %s27
      %s31 = sadd.s32 %s30, 1
      %p34 = scmp.eq.s32.totalorder %s10, 3
      %p35 = scmp.ne.s32.totalorder %s30, %s32
      %p36 = scmp.eq.s32.totalorder %s10, 0
      %p37 = por %p35, %p36
      %p38 = scmp.ne.s32.totalorder %s30, %s32
      %p39 = scmp.eq.s32.totalorder %s15, 3
      %p40 = por %p38, %p39
      %p41 = scmp.ne.s32.totalorder %s32, %s33
      %p42 = scmp.eq.s32.totalorder %s15, 0
      %p43 = por %p41, %p42
      %p44 = scmp.ne.s32.totalorder %s32, %s33
      %p45 = scmp.eq.s32.totalorder %s16, 3
      %p46 = por %p44, %p45
      %p48 = scmp.ne.s32.totalorder %s33, %s47
      %p49 = scmp.eq.s32.totalorder %s16, 0
      %p50 = por %p48, %p49
      %s51 = ssub.s32 %s18, %s25
      %p52 = scmp.eq.s32.totalorder %s51, 0
      %s54 = sadd.s32 %s53, 1
      %s55 = scalar_select %p52, %s53, %s54
      %p58 = pneg %p52
      %p59 = scmp.eq.s32.totalorder %s10, 3
      %p60 = por %p58, %p59
      %p61 = scmp.ne.s32.totalorder %s53, %s56
      %p62 = scmp.eq.s32.totalorder %s10, 0
      %p63 = por %p61, %p62
      %p64 = scmp.ne.s32.totalorder %s53, %s56
      %p65 = scmp.eq.s32.totalorder %s15, 3
      %p66 = por %p64, %p65
      %p67 = scmp.ne.s32.totalorder %s56, %s57
      %p68 = scmp.eq.s32.totalorder %s15, 0
      %p69 = por %p67, %p68
      %p70 = scmp.ne.s32.totalorder %s56, %s57
      %p71 = scmp.eq.s32.totalorder %s16, 3
      %p72 = por %p70, %p71
      %p74 = scmp.ne.s32.totalorder %s57, %s73
      %p75 = scmp.eq.s32.totalorder %s16, 0
      %p76 = por %p74, %p75
      %s77 = ssub.s32 %s18, %s25
      %p78 = scmp.eq.s32.totalorder %s77, 0
      %s80 = sadd.s32 %s79, 1
      %s81 = scalar_select %p78, %s79, %s80
      %p84 = pneg %p78
      %p85 = scmp.eq.s32.totalorder %s10, 3
      %p86 = por %p84, %p85
      %p87 = scmp.ne.s32.totalorder %s79, %s82
      %p88 = scmp.eq.s32.totalorder %s10, 0
      %p89 = por %p87, %p88
      %p90 = scmp.ne.s32.totalorder %s79, %s82
      %p91 = scmp.eq.s32.totalorder %s15, 3
      %p92 = por %p90, %p91
      %p93 = scmp.ne.s32.totalorder %s82, %s83
      %p94 = scmp.eq.s32.totalorder %s15, 0
      %p95 = por %p93, %p94
      %p96 = scmp.ne.s32.totalorder %s82, %s83
      %p97 = scmp.eq.s32.totalorder %s16, 3
      %p98 = por %p96, %p97
      %p100 = scmp.ne.s32.totalorder %s83, %s99
      %p101 = scmp.eq.s32.totalorder %s16, 0
      %p102 = por %p100, %p101
      %s104 = sadd.s32 %s103, 1
      %p107 = scmp.eq.s32.totalorder %s10, 3
      %p108 = scmp.ne.s32.totalorder %s103, %s105
      %p109 = scmp.eq.s32.totalorder %s10, 0
      %p110 = por %p108, %p109
      %p111 = scmp.ne.s32.totalorder %s103, %s105
      %p112 = scmp.eq.s32.totalorder %s15, 3
      %p113 = por %p111, %p112
      %p114 = scmp.ne.s32.totalorder %s105, %s106
      %p115 = scmp.eq.s32.totalorder %s15, 0
      %p116 = por %p114, %p115
      %p117 = scmp.ne.s32.totalorder %s105, %s106
      %p118 = scmp.eq.s32.totalorder %s16, 3
      %p119 = por %p117, %p118
      %p121 = scmp.ne.s32.totalorder %s106, %s120
      %p122 = scmp.eq.s32.totalorder %s16, 0
      %p123 = por %p121, %p122
      %s124 = ssub.s32 %s17, %s29
      %s125 = ssub.s32 %s18, %s25
      %s126 = sor.u32 %s124, %s125
      %p127 = scmp.eq.s32.totalorder %s126, 0
      %s129 = sadd.s32 %s128, 1
      %s130 = scalar_select %p127, %s128, %s129
      %p133 = pneg %p127
      %p134 = scmp.eq.s32.totalorder %s10, 3
      %p135 = por %p133, %p134
      %p136 = scmp.ne.s32.totalorder %s128, %s131
      %p137 = scmp.eq.s32.totalorder %s10, 0
      %p138 = por %p136, %p137
      %p139 = scmp.ne.s32.totalorder %s128, %s131
      %p140 = scmp.eq.s32.totalorder %s15, 3
      %p141 = por %p139, %p140
      %p142 = scmp.ne.s32.totalorder %s131, %s132
      %p143 = scmp.eq.s32.totalorder %s15, 0
      %p144 = por %p142, %p143
      %p145 = scmp.ne.s32.totalorder %s131, %s132
      %p146 = scmp.eq.s32.totalorder %s16, 3
      %p147 = por %p145, %p146
      %p149 = scmp.ne.s32.totalorder %s132, %s148
      %p150 = scmp.eq.s32.totalorder %s16, 0
      %p151 = por %p149, %p150
      %p152 = scmp.le.s32.totalorder 1, %s10
      %p153 = scmp.lt.s32.totalorder %s10, 5
      %p154 = pnand %p152, %p153
      %p155 = pneg %p154
      // Predicated region
      $region9: #{forward.3} parent=5 // pred_check
        _
      $region10: #{forward.3} parent=5 // pred_check_branch
        %157 = sbr.rel (%p154) target = $region12
      $region11: #{forward.3} parent=5 // pred_region
        %s158 = ssub.s32 %s10, 1
        // Predicated region
        $region13: #{forward.3} parent=11 // pred_check
          %p159 = pneg %p43
        $region14: #{forward.3} parent=11 // pred_check_branch
          %161 = sbr.rel (%p159) target = $region16
        $region15: #{forward.3} parent=11 // pred_region
          _
        $region16: #{forward.3} parent=11 // pred_fallthru
          _
        // Predicated region
        $region17: #{forward.3} parent=11 // pred_check
          %p162 = pneg %p116
        $region18: #{forward.3} parent=11 // pred_check_branch
          %164 = sbr.rel (%p162) target = $region20
        $region19: #{forward.3} parent=11 // pred_region
          _
        $region20: #{forward.3} parent=11 // pred_fallthru
          _
      $region12: #{forward.3} parent=5 // pred_fallthru
        _
      %p165 = scmp.lt.s32.totalorder %s10, 4
      // Predicated region
      $region21: #{forward.3} parent=5 // pred_check
        %p166 = pneg %p165
      $region22: #{forward.3} parent=5 // pred_check_branch
        %168 = sbr.rel (%p166) target = $region24
      $region23: #{forward.3} parent=5 // pred_region
        // Predicated region
        $region25: #{forward.3} parent=23 // pred_check
          %p169 = pneg %p63
        $region26: #{forward.3} parent=23 // pred_check_branch
          %171 = sbr.rel (%p169) target = $region28
        $region27: #{forward.3} parent=23 // pred_region
          %s172 = sand.u32 %s53, 1
          %s173 = sand.u32 %s53, 1
          %s174 = smul.addr %s173, 128
          %s175 = scalar_lea.vmem [#allocation2], %s174
          %s176 = smul.u32 16, %s18
          %s177 = smul.addr %s176, 4
          %s178 = scalar_lea.vmem %s1, %s177
          // Predicated region
          $region29: #{forward.3} parent=27 // pred_check
            _
          $region30: #{forward.3} parent=27 // pred_check_branch
            %180 = sbr.rel (0) target = $region32
          $region31: #{forward.3} parent=27 // pred_region
            // Predicated region
            $region33: #{forward.3} parent=31 // pred_check
              _
            $region34: #{forward.3} parent=31 // pred_check_branch
              %182 = sbr.rel (0) target = $region36
            $region35: #{forward.3} parent=31 // pred_region
              loop: start=0, step=1, limit=1
              $region37: #{forward.3} parent=35 // loop_pre_header
                _
              $region38: #{forward.3} parent=35 // loop_header
                %s184 = sphi 0, %s188
                %p185 = scmp.ge.s32.totalorder %s184, 1
                %s189 = sphi %s178, %s178
                %s190 = sphi %s175, %s175
              $region39: #{forward.3} parent=35 // loop_header_branch
                %187 = sbr.rel (%p185) target = $region43
              $region40: #{forward.3} parent=35 // loop_body
                %v191 = vld [vmem:[%s189] sm:$0xff]
                %192 = vst [vmem:[%s190] sm:$0xff] %v191
                %v193 = vld [vmem:[%s189 + $0x8] sm:$0xff]
                %194 = vst [vmem:[%s190 + $0x8] sm:$0xff] %v193
                %v195 = vld [vmem:[%s189 + $0x10] sm:$0xff]
                %196 = vst [vmem:[%s190 + $0x10] sm:$0xff] %v195
                %v197 = vld [vmem:[%s189 + $0x18] sm:$0xff]
                %198 = vst [vmem:[%s190 + $0x18] sm:$0xff] %v197
                %v199 = vld [vmem:[%s189 + $0x20] sm:$0xff]
                %200 = vst [vmem:[%s190 + $0x20] sm:$0xff] %v199
                %v201 = vld [vmem:[%s189 + $0x28] sm:$0xff]
                %202 = vst [vmem:[%s190 + $0x28] sm:$0xff] %v201
                %v203 = vld [vmem:[%s189 + $0x30] sm:$0xff]
                %204 = vst [vmem:[%s190 + $0x30] sm:$0xff] %v203
                %v205 = vld [vmem:[%s189 + $0x38] sm:$0xff]
                %206 = vst [vmem:[%s190 + $0x38] sm:$0xff] %v205
                %v207 = vld [vmem:[%s189 + $0x100] sm:$0xff]
                %208 = vst [vmem:[%s190 + $0x40] sm:$0xff] %v207
                %v209 = vld [vmem:[%s189 + $0x108] sm:$0xff]
                %210 = vst [vmem:[%s190 + $0x48] sm:$0xff] %v209
                %v211 = vld [vmem:[%s189 + $0x110] sm:$0xff]
                %212 = vst [vmem:[%s190 + $0x50] sm:$0xff] %v211
                %v213 = vld [vmem:[%s189 + $0x118] sm:$0xff]
                %214 = vst [vmem:[%s190 + $0x58] sm:$0xff] %v213
                %v215 = vld [vmem:[%s189 + $0x120] sm:$0xff]
                %216 = vst [vmem:[%s190 + $0x60] sm:$0xff] %v215
                %v217 = vld [vmem:[%s189 + $0x128] sm:$0xff]
                %218 = vst [vmem:[%s190 + $0x68] sm:$0xff] %v217
                %v219 = vld [vmem:[%s189 + $0x130] sm:$0xff]
                %220 = vst [vmem:[%s190 + $0x70] sm:$0xff] %v219
                %v221 = vld [vmem:[%s189 + $0x138] sm:$0xff]
                %222 = vst [vmem:[%s190 + $0x78] sm:$0xff] %v221
              $region41: #{forward.3} parent=35 // loop_footer
                %s188 = sadd.s32 1, %s184
              $region42: #{forward.3} parent=35 // loop_footer_branch
                %183 = sbr.rel target = $region38
              $region43: #{forward.3} parent=35 // loop_exit
                _
            $region36: #{forward.3} parent=31 // pred_fallthru
              _
            // Predicated region
            $region44: #{forward.3} parent=31 // pred_check
              _
            $region45: #{forward.3} parent=31 // pred_check_branch
              %224 = sbr.rel target = $region47
            $region46: #{forward.3} parent=31 // pred_region
              _
            $region47: #{forward.3} parent=31 // pred_fallthru
              _
          $region32: #{forward.3} parent=27 // pred_fallthru
            _
          %225 = vnop
        $region28: #{forward.3} parent=23 // pred_fallthru
          _
        // Predicated region
        $region48: #{forward.3} parent=23 // pred_check
          %p226 = pneg %p89
        $region49: #{forward.3} parent=23 // pred_check_branch
          %228 = sbr.rel (%p226) target = $region51
        $region50: #{forward.3} parent=23 // pred_region
          %s229 = smul.u32 16, %s18
          %p230 = scmp.lt.s32.totalorder %s229, 63
          %s231 = scalar_select %p230, %s229, 63
          %s232 = scalar_lea.vmem %s2, %s231
          %s233 = smul.u32 16, %s18
        $region51: #{forward.3} parent=23 // pred_fallthru
          _
      $region24: #{forward.3} parent=5 // pred_fallthru
        _
      %p234 = scmp.le.s32.totalorder 1, %s10
      %p235 = scmp.lt.s32.totalorder %s10, 5
      %p236 = pnand %p234, %p235
      %p237 = pneg %p236
      // Predicated region
      $region52: #{forward.3} parent=5 // pred_check
        _
      $region53: #{forward.3} parent=5 // pred_check_branch
        %239 = sbr.rel (%p236) target = $region55
      $region54: #{forward.3} parent=5 // pred_region
        %s240 = ssub.s32 %s10, 1
        %s241 = sand.u32 %s56, 1
        %s242 = sand.u32 %s56, 1
        %s243 = smul.addr %s242, 128
        %s244 = scalar_lea.vmem [#allocation2], %s243
        // Predicated region
        $region56: #{forward.3} parent=54 // pred_check
          %p245 = pneg %p69
        $region57: #{forward.3} parent=54 // pred_check_branch
          %247 = sbr.rel (%p245) target = $region59
        $region58: #{forward.3} parent=54 // pred_region
          _
        $region59: #{forward.3} parent=54 // pred_fallthru
          _
        %p248 = pneg %p43
        %p249 = pneg %p40
        %s250 = sand.u32 %s56, 1
        %s251 = sand.u32 %s56, 1
        %s252 = smul.addr %s251, 128
        %s253 = scalar_lea.vmem [#allocation2], %s252
        %p254 = pneg %p69
        %p255 = pneg %p66
        %s256 = smul.u32 16, %s20
        %p257 = scmp.lt.s32.totalorder %s256, 63
        %s258 = scalar_select %p257, %s256, 63
        %s259 = scalar_lea.vmem %s2, %s258
        %p260 = pneg %p95
        %p261 = pneg %p92
        %p262 = pneg %p116
        %p263 = pneg %p113
        %p264 = pneg %p144
        %p265 = pneg %p141
        %s266 = sand.u32 %s131, 1
        %s267 = sand.u32 %s131, 1
        %s268 = smul.addr %s267, 256
        %s269 = scalar_lea.vmem [#allocation3], %s268
        %s270 = smul.u32 16, %s20
        %s271 = smul.u32 16, %s20
        %p272 = scmp.lt.s32.totalorder %s271, 63
        %s273 = scalar_select %p272, %s271, 63
        %s274 = scalar_lea.vmem %s2, %s273
        %s275 = smul.u32 16, %s20
        %s276 = smul.u32 2, %s19
        %s277 = smul.u32 16, %s20
        %v279 = vld [vmem:[%s0] sm:$0x1]
        %v280 = vld [vmem:[%s244] sm:$0xff]
        %v281 = vld [vmem:[%s244 + $0x8] sm:$0xff]
        %v282 = vld [vmem:[%s244 + $0x10] sm:$0xff]
        %v283 = vld [vmem:[%s244 + $0x18] sm:$0xff]
        %v284 = vld [vmem:[%s244 + $0x20] sm:$0xff]
        %v285 = vld [vmem:[%s244 + $0x28] sm:$0xff]
        %v286 = vld [vmem:[%s244 + $0x30] sm:$0xff]
        %v287 = vld [vmem:[%s244 + $0x38] sm:$0xff]
        %v288 = vld [vmem:[%s244 + $0x40] sm:$0xff]
        %v289 = vld [vmem:[%s244 + $0x48] sm:$0xff]
        %v290 = vld [vmem:[%s244 + $0x50] sm:$0xff]
        %v291 = vld [vmem:[%s244 + $0x58] sm:$0xff]
        %v292 = vld [vmem:[%s244 + $0x60] sm:$0xff]
        %v293 = vld [vmem:[%s244 + $0x68] sm:$0xff]
        %v294 = vld [vmem:[%s244 + $0x70] sm:$0xff]
        %v295 = vld [vmem:[%s244 + $0x78] sm:$0xff]
        %v296 = vld [vmem:[%s274] sm:$0xff]
        %v297 = vld [vmem:[%s274 + $0x8] sm:$0xff]
        %v300 = vlaneseq
        %v301 = vshrl.u32 %v300, 7
        %v302 = vsub.s32 0, %v301
        %v303 = vrot.slane %v296, %v302
        %v304 = vlaneseq
        %v305 = vshrl.u32 %v304, 7
        %v306 = vsub.s32 1, %v305
        %v307 = vrot.slane %v296, %v306
        %v308 = vlaneseq
        %v309 = vshrl.u32 %v308, 7
        %v310 = vsub.s32 2, %v309
        %v311 = vrot.slane %v296, %v310
        %v312 = vlaneseq
        %v313 = vshrl.u32 %v312, 7
        %v314 = vsub.s32 3, %v313
        %v315 = vrot.slane %v296, %v314
        %v316 = vlaneseq
        %v317 = vshrl.u32 %v316, 7
        %v318 = vsub.s32 4, %v317
        %v319 = vrot.slane %v296, %v318
        %v320 = vlaneseq
        %v321 = vshrl.u32 %v320, 7
        %v322 = vsub.s32 5, %v321
        %v323 = vrot.slane %v296, %v322
        %v324 = vlaneseq
        %v325 = vshrl.u32 %v324, 7
        %v326 = vsub.s32 6, %v325
        %v327 = vrot.slane %v296, %v326
        %v328 = vlaneseq
        %v329 = vshrl.u32 %v328, 7
        %v330 = vsub.s32 7, %v329
        %v331 = vrot.slane %v296, %v330
        %v332 = vlaneseq
        %v333 = vshrl.u32 %v332, 7
        %v334 = vsub.s32 0, %v333
        %v335 = vrot.slane %v297, %v334
        %v336 = vlaneseq
        %v337 = vshrl.u32 %v336, 7
        %v338 = vsub.s32 1, %v337
        %v339 = vrot.slane %v297, %v338
        %v340 = vlaneseq
        %v341 = vshrl.u32 %v340, 7
        %v342 = vsub.s32 2, %v341
        %v343 = vrot.slane %v297, %v342
        %v344 = vlaneseq
        %v345 = vshrl.u32 %v344, 7
        %v346 = vsub.s32 3, %v345
        %v347 = vrot.slane %v297, %v346
        %v348 = vlaneseq
        %v349 = vshrl.u32 %v348, 7
        %v350 = vsub.s32 4, %v349
        %v351 = vrot.slane %v297, %v350
        %v352 = vlaneseq
        %v353 = vshrl.u32 %v352, 7
        %v354 = vsub.s32 5, %v353
        %v355 = vrot.slane %v297, %v354
        %v356 = vlaneseq
        %v357 = vshrl.u32 %v356, 7
        %v358 = vsub.s32 6, %v357
        %v359 = vrot.slane %v297, %v358
        %v360 = vlaneseq
        %v361 = vshrl.u32 %v360, 7
        %v362 = vsub.s32 7, %v361
        %v363 = vrot.slane %v297, %v362
        %v396 = vunpack.c.l.b16 %v280
        %v397 = vunpack.c.h.b16 %v280
        %v398 = vunpack.c.l.b16 %v281
        %v399 = vunpack.c.h.b16 %v281
        %v400 = vunpack.c.l.b16 %v282
        %v401 = vunpack.c.h.b16 %v282
        %v402 = vunpack.c.l.b16 %v283
        %v403 = vunpack.c.h.b16 %v283
        %v404 = vunpack.c.l.b16 %v284
        %v405 = vunpack.c.h.b16 %v284
        %v406 = vunpack.c.l.b16 %v285
        %v407 = vunpack.c.h.b16 %v285
        %v408 = vunpack.c.l.b16 %v286
        %v409 = vunpack.c.h.b16 %v286
        %v410 = vunpack.c.l.b16 %v287
        %v411 = vunpack.c.h.b16 %v287
        %v412 = vunpack.c.l.b16 %v288
        %v413 = vunpack.c.h.b16 %v288
        %v414 = vunpack.c.l.b16 %v289
        %v415 = vunpack.c.h.b16 %v289
        %v416 = vunpack.c.l.b16 %v290
        %v417 = vunpack.c.h.b16 %v290
        %v418 = vunpack.c.l.b16 %v291
        %v419 = vunpack.c.h.b16 %v291
        %v420 = vunpack.c.l.b16 %v292
        %v421 = vunpack.c.h.b16 %v292
        %v422 = vunpack.c.l.b16 %v293
        %v423 = vunpack.c.h.b16 %v293
        %v424 = vunpack.c.l.b16 %v294
        %v425 = vunpack.c.h.b16 %v294
        %v426 = vunpack.c.l.b16 %v295
        %v427 = vunpack.c.h.b16 %v295
        %v428 = vpack.c.b16 %v412, %v396
        %v429 = vpack.c.b16 %v413, %v397
        %v430 = vpack.c.b16 %v414, %v398
        %v431 = vpack.c.b16 %v415, %v399
        %v432 = vpack.c.b16 %v416, %v400
        %v433 = vpack.c.b16 %v417, %v401
        %v434 = vpack.c.b16 %v418, %v402
        %v435 = vpack.c.b16 %v419, %v403
        %v436 = vpack.c.b16 %v420, %v404
        %v437 = vpack.c.b16 %v421, %v405
        %v438 = vpack.c.b16 %v422, %v406
        %v439 = vpack.c.b16 %v423, %v407
        %v440 = vpack.c.b16 %v424, %v408
        %v441 = vpack.c.b16 %v425, %v409
        %v442 = vpack.c.b16 %v426, %v410
        %v443 = vpack.c.b16 %v427, %v411
        %vm460 = vcmask 130048
        %v462 = vsel %vm460, %v279, 0
        %464 = vmatprep.subr.bf16.mxu0 %v429
        %465 = vmatpush1.bf16.msra.mxu0 %v428
        %466 = vmatprep.subr.bf16.mxu0 0
        %467 = vmatpush1.bf16.msra.mxu0 0
        %468 = vmatprep.subr.bf16.mxu0 0
        %469 = vmatpush1.bf16.msra.mxu0 0
        %470 = vmatprep.subr.bf16.mxu0 0
        %471 = vmatpush1.bf16.msra.mxu0 0
        %472 = vmatprep.subr.bf16.mxu0 0
        %473 = vmatpush1.bf16.msra.mxu0 0
        %474 = vmatprep.subr.bf16.mxu0 0
        %475 = vmatpush1.bf16.msra.mxu0 0
        %476 = vmatprep.subr.bf16.mxu0 0
        %477 = vmatpush1.bf16.msra.mxu0 0
        %478 = vmatprep.subr.bf16.mxu0 0
        %479 = vmatpush1.bf16.msra.mxu0 0
        %480 = vmatprep.subr.bf16.mxu0 0
        %481 = vmatpush1.bf16.msra.mxu0 0
        %482 = vmatprep.subr.bf16.mxu0 0
        %483 = vmatpush1.bf16.msra.mxu0 0
        %484 = vmatprep.subr.bf16.mxu0 0
        %485 = vmatpush1.bf16.msra.mxu0 0
        %486 = vmatprep.subr.bf16.mxu0 0
        %487 = vmatpush1.bf16.msra.mxu0 0
        %488 = vmatprep.subr.bf16.mxu0 0
        %489 = vmatpush1.bf16.msra.mxu0 0
        %490 = vmatprep.subr.bf16.mxu0 0
        %491 = vmatpush1.bf16.msra.mxu0 0
        %492 = vmatprep.subr.bf16.mxu0 0
        %493 = vmatpush1.bf16.msra.mxu0 0
        %494 = vmatprep.subr.bf16.mxu0 0
        %495 = vmatpush1.bf16.msra.mxu0 0
        %496 = vmatprep.mubr.bf16.mxu0 0
        %497 = vmatmul.mubr.bf16.gmra.mrb[0].mxu0 %v462
        %v498 = vpop.f32.mrb[0].mxu0
        %v499 = vadd.f32 %v303, %v498
        %v500 = vpop.f32.mrb[0].mxu0
        %v501 = vadd.f32 %v307, %v500
        %v502 = vpop.f32.mrb[0].mxu0
        %v503 = vpop.f32.mrb[0].mxu0
        %504 = vdwg.mxu0
        %505 = vmatprep.subr.bf16.mxu0 %v431
        %506 = vmatpush1.bf16.msra.mxu0 %v430
        %507 = vmatprep.subr.bf16.mxu0 0
        %508 = vmatpush1.bf16.msra.mxu0 0
        %509 = vmatprep.subr.bf16.mxu0 0
        %510 = vmatpush1.bf16.msra.mxu0 0
        %511 = vmatprep.subr.bf16.mxu0 0
        %512 = vmatpush1.bf16.msra.mxu0 0
        %513 = vmatprep.subr.bf16.mxu0 0
        %514 = vmatpush1.bf16.msra.mxu0 0
        %515 = vmatprep.subr.bf16.mxu0 0
        %516 = vmatpush1.bf16.msra.mxu0 0
        %517 = vmatprep.subr.bf16.mxu0 0
        %518 = vmatpush1.bf16.msra.mxu0 0
        %519 = vmatprep.subr.bf16.mxu0 0
        %520 = vmatpush1.bf16.msra.mxu0 0
        %521 = vmatprep.subr.bf16.mxu0 0
        %522 = vmatpush1.bf16.msra.mxu0 0
        %523 = vmatprep.subr.bf16.mxu0 0
        %524 = vmatpush1.bf16.msra.mxu0 0
        %525 = vmatprep.subr.bf16.mxu0 0
        %526 = vmatpush1.bf16.msra.mxu0 0
        %527 = vmatprep.subr.bf16.mxu0 0
        %528 = vmatpush1.bf16.msra.mxu0 0
        %529 = vmatprep.subr.bf16.mxu0 0
        %530 = vmatpush1.bf16.msra.mxu0 0
        %531 = vmatprep.subr.bf16.mxu0 0
        %532 = vmatpush1.bf16.msra.mxu0 0
        %533 = vmatprep.subr.bf16.mxu0 0
        %534 = vmatpush1.bf16.msra.mxu0 0
        %535 = vmatprep.subr.bf16.mxu0 0
        %536 = vmatpush1.bf16.msra.mxu0 0
        %537 = vmatprep.mubr.bf16.mxu0 0
        %538 = vmatmul.mubr.bf16.gmra.mrb[0].mxu0 %v462
        %v539 = vpop.f32.mrb[0].mxu0
        %v540 = vadd.f32 %v311, %v539
        %v541 = vpop.f32.mrb[0].mxu0
        %v542 = vadd.f32 %v315, %v541
        %v543 = vpop.f32.mrb[0].mxu0
        %v544 = vpop.f32.mrb[0].mxu0
        %545 = vdwg.mxu0
        %546 = vmatprep.subr.bf16.mxu0 %v433
        %547 = vmatpush1.bf16.msra.mxu0 %v432
        %548 = vmatprep.subr.bf16.mxu0 0
        %549 = vmatpush1.bf16.msra.mxu0 0
        %550 = vmatprep.subr.bf16.mxu0 0
        %551 = vmatpush1.bf16.msra.mxu0 0
        %552 = vmatprep.subr.bf16.mxu0 0
        %553 = vmatpush1.bf16.msra.mxu0 0
        %554 = vmatprep.subr.bf16.mxu0 0
        %555 = vmatpush1.bf16.msra.mxu0 0
        %556 = vmatprep.subr.bf16.mxu0 0
        %557 = vmatpush1.bf16.msra.mxu0 0
        %558 = vmatprep.subr.bf16.mxu0 0
        %559 = vmatpush1.bf16.msra.mxu0 0
        %560 = vmatprep.subr.bf16.mxu0 0
        %561 = vmatpush1.bf16.msra.mxu0 0
        %562 = vmatprep.subr.bf16.mxu0 0
        %563 = vmatpush1.bf16.msra.mxu0 0
        %564 = vmatprep.subr.bf16.mxu0 0
        %565 = vmatpush1.bf16.msra.mxu0 0
        %566 = vmatprep.subr.bf16.mxu0 0
        %567 = vmatpush1.bf16.msra.mxu0 0
        %568 = vmatprep.subr.bf16.mxu0 0
        %569 = vmatpush1.bf16.msra.mxu0 0
        %570 = vmatprep.subr.bf16.mxu0 0
        %571 = vmatpush1.bf16.msra.mxu0 0
        %572 = vmatprep.subr.bf16.mxu0 0
        %573 = vmatpush1.bf16.msra.mxu0 0
        %574 = vmatprep.subr.bf16.mxu0 0
        %575 = vmatpush1.bf16.msra.mxu0 0
        %576 = vmatprep.subr.bf16.mxu0 0
        %577 = vmatpush1.bf16.msra.mxu0 0
        %578 = vmatprep.mubr.bf16.mxu0 0
        %579 = vmatmul.mubr.bf16.gmra.mrb[0].mxu0 %v462
        %v580 = vpop.f32.mrb[0].mxu0
        %v581 = vadd.f32 %v319, %v580
        %v582 = vpop.f32.mrb[0].mxu0
        %v583 = vadd.f32 %v323, %v582
        %v584 = vpop.f32.mrb[0].mxu0
        %v585 = vpop.f32.mrb[0].mxu0
        %586 = vdwg.mxu0
        %587 = vmatprep.subr.bf16.mxu0 %v435
        %588 = vmatpush1.bf16.msra.mxu0 %v434
        %589 = vmatprep.subr.bf16.mxu0 0
        %590 = vmatpush1.bf16.msra.mxu0 0
        %591 = vmatprep.subr.bf16.mxu0 0
        %592 = vmatpush1.bf16.msra.mxu0 0
        %593 = vmatprep.subr.bf16.mxu0 0
        %594 = vmatpush1.bf16.msra.mxu0 0
        %595 = vmatprep.subr.bf16.mxu0 0
        %596 = vmatpush1.bf16.msra.mxu0 0
        %597 = vmatprep.subr.bf16.mxu0 0
        %598 = vmatpush1.bf16.msra.mxu0 0
        %599 = vmatprep.subr.bf16.mxu0 0
        %600 = vmatpush1.bf16.msra.mxu0 0
        %601 = vmatprep.subr.bf16.mxu0 0
        %602 = vmatpush1.bf16.msra.mxu0 0
        %603 = vmatprep.subr.bf16.mxu0 0
        %604 = vmatpush1.bf16.msra.mxu0 0
        %605 = vmatprep.subr.bf16.mxu0 0
        %606 = vmatpush1.bf16.msra.mxu0 0
        %607 = vmatprep.subr.bf16.mxu0 0
        %608 = vmatpush1.bf16.msra.mxu0 0
        %609 = vmatprep.subr.bf16.mxu0 0
        %610 = vmatpush1.bf16.msra.mxu0 0
        %611 = vmatprep.subr.bf16.mxu0 0
        %612 = vmatpush1.bf16.msra.mxu0 0
        %613 = vmatprep.subr.bf16.mxu0 0
        %614 = vmatpush1.bf16.msra.mxu0 0
        %615 = vmatprep.subr.bf16.mxu0 0
        %616 = vmatpush1.bf16.msra.mxu0 0
        %617 = vmatprep.subr.bf16.mxu0 0
        %618 = vmatpush1.bf16.msra.mxu0 0
        %619 = vmatprep.mubr.bf16.mxu0 0
        %620 = vmatmul.mubr.bf16.gmra.mrb[0].mxu0 %v462
        %v621 = vpop.f32.mrb[0].mxu0
        %v622 = vadd.f32 %v327, %v621
        %v623 = vpop.f32.mrb[0].mxu0
        %v624 = vadd.f32 %v331, %v623
        %v625 = vpop.f32.mrb[0].mxu0
        %v626 = vpop.f32.mrb[0].mxu0
        %627 = vdwg.mxu0
        %628 = vmatprep.subr.bf16.mxu0 %v437
        %629 = vmatpush1.bf16.msra.mxu0 %v436
        %630 = vmatprep.subr.bf16.mxu0 0
        %631 = vmatpush1.bf16.msra.mxu0 0
        %632 = vmatprep.subr.bf16.mxu0 0
        %633 = vmatpush1.bf16.msra.mxu0 0
        %634 = vmatprep.subr.bf16.mxu0 0
        %635 = vmatpush1.bf16.msra.mxu0 0
        %636 = vmatprep.subr.bf16.mxu0 0
        %637 = vmatpush1.bf16.msra.mxu0 0
        %638 = vmatprep.subr.bf16.mxu0 0
        %639 = vmatpush1.bf16.msra.mxu0 0
        %640 = vmatprep.subr.bf16.mxu0 0
        %641 = vmatpush1.bf16.msra.mxu0 0
        %642 = vmatprep.subr.bf16.mxu0 0
        %643 = vmatpush1.bf16.msra.mxu0 0
        %644 = vmatprep.subr.bf16.mxu0 0
        %645 = vmatpush1.bf16.msra.mxu0 0
        %646 = vmatprep.subr.bf16.mxu0 0
        %647 = vmatpush1.bf16.msra.mxu0 0
        %648 = vmatprep.subr.bf16.mxu0 0
        %649 = vmatpush1.bf16.msra.mxu0 0
        %650 = vmatprep.subr.bf16.mxu0 0
        %651 = vmatpush1.bf16.msra.mxu0 0
        %652 = vmatprep.subr.bf16.mxu0 0
        %653 = vmatpush1.bf16.msra.mxu0 0
        %654 = vmatprep.subr.bf16.mxu0 0
        %655 = vmatpush1.bf16.msra.mxu0 0
        %656 = vmatprep.subr.bf16.mxu0 0
        %657 = vmatpush1.bf16.msra.mxu0 0
        %658 = vmatprep.subr.bf16.mxu0 0
        %659 = vmatpush1.bf16.msra.mxu0 0
        %660 = vmatprep.mubr.bf16.mxu0 0
        %661 = vmatmul.mubr.bf16.gmra.mrb[0].mxu0 %v462
        %v662 = vpop.f32.mrb[0].mxu0
        %v663 = vadd.f32 %v335, %v662
        %v664 = vpop.f32.mrb[0].mxu0
        %v665 = vadd.f32 %v339, %v664
        %v666 = vpop.f32.mrb[0].mxu0
        %v667 = vpop.f32.mrb[0].mxu0
        %668 = vdwg.mxu0
        %669 = vmatprep.subr.bf16.mxu0 %v439
        %670 = vmatpush1.bf16.msra.mxu0 %v438
        %671 = vmatprep.subr.bf16.mxu0 0
        %672 = vmatpush1.bf16.msra.mxu0 0
        %673 = vmatprep.subr.bf16.mxu0 0
        %674 = vmatpush1.bf16.msra.mxu0 0
        %675 = vmatprep.subr.bf16.mxu0 0
        %676 = vmatpush1.bf16.msra.mxu0 0
        %677 = vmatprep.subr.bf16.mxu0 0
        %678 = vmatpush1.bf16.msra.mxu0 0
        %679 = vmatprep.subr.bf16.mxu0 0
        %680 = vmatpush1.bf16.msra.mxu0 0
        %681 = vmatprep.subr.bf16.mxu0 0
        %682 = vmatpush1.bf16.msra.mxu0 0
        %683 = vmatprep.subr.bf16.mxu0 0
        %684 = vmatpush1.bf16.msra.mxu0 0
        %685 = vmatprep.subr.bf16.mxu0 0
        %686 = vmatpush1.bf16.msra.mxu0 0
        %687 = vmatprep.subr.bf16.mxu0 0
        %688 = vmatpush1.bf16.msra.mxu0 0
        %689 = vmatprep.subr.bf16.mxu0 0
        %690 = vmatpush1.bf16.msra.mxu0 0
        %691 = vmatprep.subr.bf16.mxu0 0
        %692 = vmatpush1.bf16.msra.mxu0 0
        %693 = vmatprep.subr.bf16.mxu0 0
        %694 = vmatpush1.bf16.msra.mxu0 0
        %695 = vmatprep.subr.bf16.mxu0 0
        %696 = vmatpush1.bf16.msra.mxu0 0
        %697 = vmatprep.subr.bf16.mxu0 0
        %698 = vmatpush1.bf16.msra.mxu0 0
        %699 = vmatprep.subr.bf16.mxu0 0
        %700 = vmatpush1.bf16.msra.mxu0 0
        %701 = vmatprep.mubr.bf16.mxu0 0
        %702 = vmatmul.mubr.bf16.gmra.mrb[0].mxu0 %v462
        %v703 = vpop.f32.mrb[0].mxu0
        %v704 = vadd.f32 %v343, %v703
        %v705 = vpop.f32.mrb[0].mxu0
        %v706 = vadd.f32 %v347, %v705
        %v707 = vpop.f32.mrb[0].mxu0
        %v708 = vpop.f32.mrb[0].mxu0
        %709 = vdwg.mxu0
        %710 = vmatprep.subr.bf16.mxu0 %v441
        %711 = vmatpush1.bf16.msra.mxu0 %v440
        %712 = vmatprep.subr.bf16.mxu0 0
        %713 = vmatpush1.bf16.msra.mxu0 0
        %714 = vmatprep.subr.bf16.mxu0 0
        %715 = vmatpush1.bf16.msra.mxu0 0
        %716 = vmatprep.subr.bf16.mxu0 0
        %717 = vmatpush1.bf16.msra.mxu0 0
        %718 = vmatprep.subr.bf16.mxu0 0
        %719 = vmatpush1.bf16.msra.mxu0 0
        %720 = vmatprep.subr.bf16.mxu0 0
        %721 = vmatpush1.bf16.msra.mxu0 0
        %722 = vmatprep.subr.bf16.mxu0 0
        %723 = vmatpush1.bf16.msra.mxu0 0
        %724 = vmatprep.subr.bf16.mxu0 0
        %725 = vmatpush1.bf16.msra.mxu0 0
        %726 = vmatprep.subr.bf16.mxu0 0
        %727 = vmatpush1.bf16.msra.mxu0 0
        %728 = vmatprep.subr.bf16.mxu0 0
        %729 = vmatpush1.bf16.msra.mxu0 0
        %730 = vmatprep.subr.bf16.mxu0 0
        %731 = vmatpush1.bf16.msra.mxu0 0
        %732 = vmatprep.subr.bf16.mxu0 0
        %733 = vmatpush1.bf16.msra.mxu0 0
        %734 = vmatprep.subr.bf16.mxu0 0
        %735 = vmatpush1.bf16.msra.mxu0 0
        %736 = vmatprep.subr.bf16.mxu0 0
        %737 = vmatpush1.bf16.msra.mxu0 0
        %738 = vmatprep.subr.bf16.mxu0 0
        %739 = vmatpush1.bf16.msra.mxu0 0
        %740 = vmatprep.subr.bf16.mxu0 0
        %741 = vmatpush1.bf16.msra.mxu0 0
        %742 = vmatprep.mubr.bf16.mxu0 0
        %743 = vmatmul.mubr.bf16.gmra.mrb[0].mxu0 %v462
        %v744 = vpop.f32.mrb[0].mxu0
        %v745 = vadd.f32 %v351, %v744
        %v746 = vpop.f32.mrb[0].mxu0
        %v747 = vadd.f32 %v355, %v746
        %v748 = vpop.f32.mrb[0].mxu0
        %v749 = vpop.f32.mrb[0].mxu0
        %750 = vdwg.mxu0
        %751 = vmatprep.subr.bf16.mxu0 %v443
        %752 = vmatpush1.bf16.msra.mxu0 %v442
        %753 = vmatprep.subr.bf16.mxu0 0
        %754 = vmatpush1.bf16.msra.mxu0 0
        %755 = vmatprep.subr.bf16.mxu0 0
        %756 = vmatpush1.bf16.msra.mxu0 0
        %757 = vmatprep.subr.bf16.mxu0 0
        %758 = vmatpush1.bf16.msra.mxu0 0
        %759 = vmatprep.subr.bf16.mxu0 0
        %760 = vmatpush1.bf16.msra.mxu0 0
        %761 = vmatprep.subr.bf16.mxu0 0
        %762 = vmatpush1.bf16.msra.mxu0 0
        %763 = vmatprep.subr.bf16.mxu0 0
        %764 = vmatpush1.bf16.msra.mxu0 0
        %765 = vmatprep.subr.bf16.mxu0 0
        %766 = vmatpush1.bf16.msra.mxu0 0
        %767 = vmatprep.subr.bf16.mxu0 0
        %768 = vmatpush1.bf16.msra.mxu0 0
        %769 = vmatprep.subr.bf16.mxu0 0
        %770 = vmatpush1.bf16.msra.mxu0 0
        %771 = vmatprep.subr.bf16.mxu0 0
        %772 = vmatpush1.bf16.msra.mxu0 0
        %773 = vmatprep.subr.bf16.mxu0 0
        %774 = vmatpush1.bf16.msra.mxu0 0
        %775 = vmatprep.subr.bf16.mxu0 0
        %776 = vmatpush1.bf16.msra.mxu0 0
        %777 = vmatprep.subr.bf16.mxu0 0
        %778 = vmatpush1.bf16.msra.mxu0 0
        %779 = vmatprep.subr.bf16.mxu0 0
        %780 = vmatpush1.bf16.msra.mxu0 0
        %781 = vmatprep.subr.bf16.mxu0 0
        %782 = vmatpush1.bf16.msra.mxu0 0
        %783 = vmatprep.mubr.bf16.mxu0 0
        %784 = vmatmul.mubr.bf16.gmra.mrb[0].mxu0 %v462
        %v785 = vpop.f32.mrb[0].mxu0
        %v786 = vadd.f32 %v359, %v785
        %v787 = vpop.f32.mrb[0].mxu0
        %v788 = vadd.f32 %v363, %v787
        %v789 = vpop.f32.mrb[0].mxu0
        %v790 = vpop.f32.mrb[0].mxu0
        %791 = vdwg.mxu0
        %v792 = vld [vmem:[%s3] sm:$0x3]
        %794 = vset.pattern.permute.xlu0 0
        %795 = vperm.xlu0 %794, %v792
        %v796 = vpop.permute.xlu0 %795
        %v798 = vsub.f32 %v499, %v796
        %v799 = vsub.f32 %v501, %v796
        %v800 = vsub.f32 %v540, %v796
        %v801 = vsub.f32 %v542, %v796
        %v802 = vsub.f32 %v581, %v796
        %v803 = vsub.f32 %v583, %v796
        %v804 = vsub.f32 %v622, %v796
        %v805 = vsub.f32 %v624, %v796
        %v806 = vsub.f32 %v663, %v796
        %v807 = vsub.f32 %v665, %v796
        %v808 = vsub.f32 %v704, %v796
        %v809 = vsub.f32 %v706, %v796
        %v810 = vsub.f32 %v745, %v796
        %v811 = vsub.f32 %v747, %v796
        %v812 = vsub.f32 %v786, %v796
        %v813 = vsub.f32 %v788, %v796
        %814 = vst [vmem:[%s269] sm:$0x3] %v798
        %815 = vst [vmem:[%s269 + $0x8] sm:$0x3] %v799
        %816 = vst [vmem:[%s269 + $0x10] sm:$0x3] %v800
        %817 = vst [vmem:[%s269 + $0x18] sm:$0x3] %v801
        %818 = vst [vmem:[%s269 + $0x20] sm:$0x3] %v802
        %819 = vst [vmem:[%s269 + $0x28] sm:$0x3] %v803
        %820 = vst [vmem:[%s269 + $0x30] sm:$0x3] %v804
        %821 = vst [vmem:[%s269 + $0x38] sm:$0x3] %v805
        %822 = vst [vmem:[%s269 + $0x40] sm:$0x3] %v806
        %823 = vst [vmem:[%s269 + $0x48] sm:$0x3] %v807
        %824 = vst [vmem:[%s269 + $0x50] sm:$0x3] %v808
        %825 = vst [vmem:[%s269 + $0x58] sm:$0x3] %v809
        %826 = vst [vmem:[%s269 + $0x60] sm:$0x3] %v810
        %827 = vst [vmem:[%s269 + $0x68] sm:$0x3] %v811
        %828 = vst [vmem:[%s269 + $0x70] sm:$0x3] %v812
        %829 = vst [vmem:[%s269 + $0x78] sm:$0x3] %v813
        %v846 = vrot.slane %v798, 6
        %v847 = vrot.slane %v799, 6
        %v848 = vrot.slane %v800, 6
        %v849 = vrot.slane %v801, 6
        %v850 = vrot.slane %v802, 6
        %v851 = vrot.slane %v803, 6
        %v852 = vrot.slane %v804, 6
        %v853 = vrot.slane %v805, 6
        %v854 = vrot.slane %v806, 6
        %v855 = vrot.slane %v807, 6
        %v856 = vrot.slane %v808, 6
        %v857 = vrot.slane %v809, 6
        %v858 = vrot.slane %v810, 6
        %v859 = vrot.slane %v811, 6
        %v860 = vrot.slane %v812, 6
        %v861 = vrot.slane %v813, 6
        %878 = vst [vmem:[%s269] sm:$0xc] %v846
        %879 = vst [vmem:[%s269 + $0x8] sm:$0xc] %v847
        %880 = vst [vmem:[%s269 + $0x10] sm:$0xc] %v848
        %881 = vst [vmem:[%s269 + $0x18] sm:$0xc] %v849
        %882 = vst [vmem:[%s269 + $0x20] sm:$0xc] %v850
        %883 = vst [vmem:[%s269 + $0x28] sm:$0xc] %v851
        %884 = vst [vmem:[%s269 + $0x30] sm:$0xc] %v852
        %885 = vst [vmem:[%s269 + $0x38] sm:$0xc] %v853
        %886 = vst [vmem:[%s269 + $0x40] sm:$0xc] %v854
        %887 = vst [vmem:[%s269 + $0x48] sm:$0xc] %v855
        %888 = vst [vmem:[%s269 + $0x50] sm:$0xc] %v856
        %889 = vst [vmem:[%s269 + $0x58] sm:$0xc] %v857
        %890 = vst [vmem:[%s269 + $0x60] sm:$0xc] %v858
        %891 = vst [vmem:[%s269 + $0x68] sm:$0xc] %v859
        %892 = vst [vmem:[%s269 + $0x70] sm:$0xc] %v860
        %893 = vst [vmem:[%s269 + $0x78] sm:$0xc] %v861
        %v894 = vrot.slane %v798, 4
        %v895 = vrot.slane %v799, 4
        %v896 = vrot.slane %v800, 4
        %v897 = vrot.slane %v801, 4
        %v898 = vrot.slane %v802, 4
        %v899 = vrot.slane %v803, 4
        %v900 = vrot.slane %v804, 4
        %v901 = vrot.slane %v805, 4
        %v902 = vrot.slane %v806, 4
        %v903 = vrot.slane %v807, 4
        %v904 = vrot.slane %v808, 4
        %v905 = vrot.slane %v809, 4
        %v906 = vrot.slane %v810, 4
        %v907 = vrot.slane %v811, 4
        %v908 = vrot.slane %v812, 4
        %v909 = vrot.slane %v813, 4
        %926 = vst [vmem:[%s269] sm:$0x30] %v894
        %927 = vst [vmem:[%s269 + $0x8] sm:$0x30] %v895
        %928 = vst [vmem:[%s269 + $0x10] sm:$0x30] %v896
        %929 = vst [vmem:[%s269 + $0x18] sm:$0x30] %v897
        %930 = vst [vmem:[%s269 + $0x20] sm:$0x30] %v898
        %931 = vst [vmem:[%s269 + $0x28] sm:$0x30] %v899
        %932 = vst [vmem:[%s269 + $0x30] sm:$0x30] %v900
        %933 = vst [vmem:[%s269 + $0x38] sm:$0x30] %v901
        %934 = vst [vmem:[%s269 + $0x40] sm:$0x30] %v902
        %935 = vst [vmem:[%s269 + $0x48] sm:$0x30] %v903
        %936 = vst [vmem:[%s269 + $0x50] sm:$0x30] %v904
        %937 = vst [vmem:[%s269 + $0x58] sm:$0x30] %v905
        %938 = vst [vmem:[%s269 + $0x60] sm:$0x30] %v906
        %939 = vst [vmem:[%s269 + $0x68] sm:$0x30] %v907
        %940 = vst [vmem:[%s269 + $0x70] sm:$0x30] %v908
        %941 = vst [vmem:[%s269 + $0x78] sm:$0x30] %v909
        %v942 = vrot.slane %v798, 2
        %v943 = vrot.slane %v799, 2
        %v944 = vrot.slane %v800, 2
        %v945 = vrot.slane %v801, 2
        %v946 = vrot.slane %v802, 2
        %v947 = vrot.slane %v803, 2
        %v948 = vrot.slane %v804, 2
        %v949 = vrot.slane %v805, 2
        %v950 = vrot.slane %v806, 2
        %v951 = vrot.slane %v807, 2
        %v952 = vrot.slane %v808, 2
        %v953 = vrot.slane %v809, 2
        %v954 = vrot.slane %v810, 2
        %v955 = vrot.slane %v811, 2
        %v956 = vrot.slane %v812, 2
        %v957 = vrot.slane %v813, 2
        %974 = vst [vmem:[%s269] sm:$0xc0] %v942
        %975 = vst [vmem:[%s269 + $0x8] sm:$0xc0] %v943
        %976 = vst [vmem:[%s269 + $0x10] sm:$0xc0] %v944
        %977 = vst [vmem:[%s269 + $0x18] sm:$0xc0] %v945
        %978 = vst [vmem:[%s269 + $0x20] sm:$0xc0] %v946
        %979 = vst [vmem:[%s269 + $0x28] sm:$0xc0] %v947
        %980 = vst [vmem:[%s269 + $0x30] sm:$0xc0] %v948
        %981 = vst [vmem:[%s269 + $0x38] sm:$0xc0] %v949
        %982 = vst [vmem:[%s269 + $0x40] sm:$0xc0] %v950
        %983 = vst [vmem:[%s269 + $0x48] sm:$0xc0] %v951
        %984 = vst [vmem:[%s269 + $0x50] sm:$0xc0] %v952
        %985 = vst [vmem:[%s269 + $0x58] sm:$0xc0] %v953
        %986 = vst [vmem:[%s269 + $0x60] sm:$0xc0] %v954
        %987 = vst [vmem:[%s269 + $0x68] sm:$0xc0] %v955
        %988 = vst [vmem:[%s269 + $0x70] sm:$0xc0] %v956
        %989 = vst [vmem:[%s269 + $0x78] sm:$0xc0] %v957
        %990 = vst [vmem:[%s269 + $0x80] sm:$0x3] %v798
        %991 = vst [vmem:[%s269 + $0x88] sm:$0x3] %v799
        %992 = vst [vmem:[%s269 + $0x90] sm:$0x3] %v800
        %993 = vst [vmem:[%s269 + $0x98] sm:$0x3] %v801
        %994 = vst [vmem:[%s269 + $0xa0] sm:$0x3] %v802
        %995 = vst [vmem:[%s269 + $0xa8] sm:$0x3] %v803
        %996 = vst [vmem:[%s269 + $0xb0] sm:$0x3] %v804
        %997 = vst [vmem:[%s269 + $0xb8] sm:$0x3] %v805
        %998 = vst [vmem:[%s269 + $0xc0] sm:$0x3] %v806
        %999 = vst [vmem:[%s269 + $0xc8] sm:$0x3] %v807
        %1000 = vst [vmem:[%s269 + $0xd0] sm:$0x3] %v808
        %1001 = vst [vmem:[%s269 + $0xd8] sm:$0x3] %v809
        %1002 = vst [vmem:[%s269 + $0xe0] sm:$0x3] %v810
        %1003 = vst [vmem:[%s269 + $0xe8] sm:$0x3] %v811
        %1004 = vst [vmem:[%s269 + $0xf0] sm:$0x3] %v812
        %1005 = vst [vmem:[%s269 + $0xf8] sm:$0x3] %v813
        %1006 = vst [vmem:[%s269 + $0x80] sm:$0xc] %v846
        %1007 = vst [vmem:[%s269 + $0x88] sm:$0xc] %v847
        %1008 = vst [vmem:[%s269 + $0x90] sm:$0xc] %v848
        %1009 = vst [vmem:[%s269 + $0x98] sm:$0xc] %v849
        %1010 = vst [vmem:[%s269 + $0xa0] sm:$0xc] %v850
        %1011 = vst [vmem:[%s269 + $0xa8] sm:$0xc] %v851
        %1012 = vst [vmem:[%s269 + $0xb0] sm:$0xc] %v852
        %1013 = vst [vmem:[%s269 + $0xb8] sm:$0xc] %v853
        %1014 = vst [vmem:[%s269 + $0xc0] sm:$0xc] %v854
        %1015 = vst [vmem:[%s269 + $0xc8] sm:$0xc] %v855
        %1016 = vst [vmem:[%s269 + $0xd0] sm:$0xc] %v856
        %1017 = vst [vmem:[%s269 + $0xd8] sm:$0xc] %v857
        %1018 = vst [vmem:[%s269 + $0xe0] sm:$0xc] %v858
        %1019 = vst [vmem:[%s269 + $0xe8] sm:$0xc] %v859
        %1020 = vst [vmem:[%s269 + $0xf0] sm:$0xc] %v860
        %1021 = vst [vmem:[%s269 + $0xf8] sm:$0xc] %v861
        %1022 = vst [vmem:[%s269 + $0x80] sm:$0x30] %v894
        %1023 = vst [vmem:[%s269 + $0x88] sm:$0x30] %v895
        %1024 = vst [vmem:[%s269 + $0x90] sm:$0x30] %v896
        %1025 = vst [vmem:[%s269 + $0x98] sm:$0x30] %v897
        %1026 = vst [vmem:[%s269 + $0xa0] sm:$0x30] %v898
        %1027 = vst [vmem:[%s269 + $0xa8] sm:$0x30] %v899
        %1028 = vst [vmem:[%s269 + $0xb0] sm:$0x30] %v900
        %1029 = vst [vmem:[%s269 + $0xb8] sm:$0x30] %v901
        %1030 = vst [vmem:[%s269 + $0xc0] sm:$0x30] %v902
        %1031 = vst [vmem:[%s269 + $0xc8] sm:$0x30] %v903
        %1032 = vst [vmem:[%s269 + $0xd0] sm:$0x30] %v904
        %1033 = vst [vmem:[%s269 + $0xd8] sm:$0x30] %v905
        %1034 = vst [vmem:[%s269 + $0xe0] sm:$0x30] %v906
        %1035 = vst [vmem:[%s269 + $0xe8] sm:$0x30] %v907
        %1036 = vst [vmem:[%s269 + $0xf0] sm:$0x30] %v908
        %1037 = vst [vmem:[%s269 + $0xf8] sm:$0x30] %v909
        %1038 = vst [vmem:[%s269 + $0x80] sm:$0xc0] %v942
        %1039 = vst [vmem:[%s269 + $0x88] sm:$0xc0] %v943
        %1040 = vst [vmem:[%s269 + $0x90] sm:$0xc0] %v944
        %1041 = vst [vmem:[%s269 + $0x98] sm:$0xc0] %v945
        %1042 = vst [vmem:[%s269 + $0xa0] sm:$0xc0] %v946
        %1043 = vst [vmem:[%s269 + $0xa8] sm:$0xc0] %v947
        %1044 = vst [vmem:[%s269 + $0xb0] sm:$0xc0] %v948
        %1045 = vst [vmem:[%s269 + $0xb8] sm:$0xc0] %v949
        %1046 = vst [vmem:[%s269 + $0xc0] sm:$0xc0] %v950
        %1047 = vst [vmem:[%s269 + $0xc8] sm:$0xc0] %v951
        %1048 = vst [vmem:[%s269 + $0xd0] sm:$0xc0] %v952
        %1049 = vst [vmem:[%s269 + $0xd8] sm:$0xc0] %v953
        %1050 = vst [vmem:[%s269 + $0xe0] sm:$0xc0] %v954
        %1051 = vst [vmem:[%s269 + $0xe8] sm:$0xc0] %v955
        %1052 = vst [vmem:[%s269 + $0xf0] sm:$0xc0] %v956
        %1053 = vst [vmem:[%s269 + $0xf8] sm:$0xc0] %v957
        %s1054 = sand.u32 %s131, 1
        %s1055 = sand.u32 %s131, 1
        %s1056 = smul.addr %s1055, 256
        %s1057 = scalar_lea.vmem [#allocation3], %s1056
        // Predicated region
        $region60: #{forward.3} parent=54 // pred_check
          %p1058 = pneg %p141
        $region61: #{forward.3} parent=54 // pred_check_branch
          %1060 = sbr.rel (%p1058) target = $region63
        $region62: #{forward.3} parent=54 // pred_region
          %s1061 = smul.u32 2, %s19
          %s1062 = smul.u32 16, %s20
          %s1063 = smul.addr %s1061, 64
          %s1064 = sadd.s32 %s1062, %s1063
          %s1065 = smul.addr %s1064, 8
          %s1066 = scalar_lea.vmem %s4, %s1065
          // Predicated region
          $region64: #{forward.3} parent=62 // pred_check
            _
          $region65: #{forward.3} parent=62 // pred_check_branch
            %1068 = sbr.rel (0) target = $region67
          $region66: #{forward.3} parent=62 // pred_region
            // Predicated region
            $region68: #{forward.3} parent=66 // pred_check
              _
            $region69: #{forward.3} parent=66 // pred_check_branch
              %1070 = sbr.rel (0) target = $region71
            $region70: #{forward.3} parent=66 // pred_region
              loop: start=0, step=1, limit=1
              $region72: #{forward.3} parent=70 // loop_pre_header
                _
              $region73: #{forward.3} parent=70 // loop_header
                %s1072 = sphi 0, %s1076
                %p1073 = scmp.ge.s32.totalorder %s1072, 1
                %s1077 = sphi %s1057, %s1057
                %s1078 = sphi %s1066, %s1066
              $region74: #{forward.3} parent=70 // loop_header_branch
                %1075 = sbr.rel (%p1073) target = $region78
              $region75: #{forward.3} parent=70 // loop_body
                %v1079 = vld [vmem:[%s1077] sm:$0xff]
                %1080 = vst [vmem:[%s1078] sm:$0xff] %v1079
                %v1081 = vld [vmem:[%s1077 + $0x8] sm:$0xff]
                %1082 = vst [vmem:[%s1078 + $0x8] sm:$0xff] %v1081
                %v1083 = vld [vmem:[%s1077 + $0x10] sm:$0xff]
                %1084 = vst [vmem:[%s1078 + $0x10] sm:$0xff] %v1083
                %v1085 = vld [vmem:[%s1077 + $0x18] sm:$0xff]
                %1086 = vst [vmem:[%s1078 + $0x18] sm:$0xff] %v1085
                %v1087 = vld [vmem:[%s1077 + $0x20] sm:$0xff]
                %1088 = vst [vmem:[%s1078 + $0x20] sm:$0xff] %v1087
                %v1089 = vld [vmem:[%s1077 + $0x28] sm:$0xff]
                %1090 = vst [vmem:[%s1078 + $0x28] sm:$0xff] %v1089
                %v1091 = vld [vmem:[%s1077 + $0x30] sm:$0xff]
                %1092 = vst [vmem:[%s1078 + $0x30] sm:$0xff] %v1091
                %v1093 = vld [vmem:[%s1077 + $0x38] sm:$0xff]
                %1094 = vst [vmem:[%s1078 + $0x38] sm:$0xff] %v1093
                %v1095 = vld [vmem:[%s1077 + $0x40] sm:$0xff]
                %1096 = vst [vmem:[%s1078 + $0x40] sm:$0xff] %v1095
                %v1097 = vld [vmem:[%s1077 + $0x48] sm:$0xff]
                %1098 = vst [vmem:[%s1078 + $0x48] sm:$0xff] %v1097
                %v1099 = vld [vmem:[%s1077 + $0x50] sm:$0xff]
                %1100 = vst [vmem:[%s1078 + $0x50] sm:$0xff] %v1099
                %v1101 = vld [vmem:[%s1077 + $0x58] sm:$0xff]
                %1102 = vst [vmem:[%s1078 + $0x58] sm:$0xff] %v1101
                %v1103 = vld [vmem:[%s1077 + $0x60] sm:$0xff]
                %1104 = vst [vmem:[%s1078 + $0x60] sm:$0xff] %v1103
                %v1105 = vld [vmem:[%s1077 + $0x68] sm:$0xff]
                %1106 = vst [vmem:[%s1078 + $0x68] sm:$0xff] %v1105
                %v1107 = vld [vmem:[%s1077 + $0x70] sm:$0xff]
                %1108 = vst [vmem:[%s1078 + $0x70] sm:$0xff] %v1107
                %v1109 = vld [vmem:[%s1077 + $0x78] sm:$0xff]
                %1110 = vst [vmem:[%s1078 + $0x78] sm:$0xff] %v1109
                %v1111 = vld [vmem:[%s1077 + $0x80] sm:$0xff]
                %1112 = vst [vmem:[%s1078 + $0x200] sm:$0xff] %v1111
                %v1113 = vld [vmem:[%s1077 + $0x88] sm:$0xff]
                %1114 = vst [vmem:[%s1078 + $0x208] sm:$0xff] %v1113
                %v1115 = vld [vmem:[%s1077 + $0x90] sm:$0xff]
                %1116 = vst [vmem:[%s1078 + $0x210] sm:$0xff] %v1115
                %v1117 = vld [vmem:[%s1077 + $0x98] sm:$0xff]
                %1118 = vst [vmem:[%s1078 + $0x218] sm:$0xff] %v1117
                %v1119 = vld [vmem:[%s1077 + $0xa0] sm:$0xff]
                %1120 = vst [vmem:[%s1078 + $0x220] sm:$0xff] %v1119
                %v1121 = vld [vmem:[%s1077 + $0xa8] sm:$0xff]
                %1122 = vst [vmem:[%s1078 + $0x228] sm:$0xff] %v1121
                %v1123 = vld [vmem:[%s1077 + $0xb0] sm:$0xff]
                %1124 = vst [vmem:[%s1078 + $0x230] sm:$0xff] %v1123
                %v1125 = vld [vmem:[%s1077 + $0xb8] sm:$0xff]
                %1126 = vst [vmem:[%s1078 + $0x238] sm:$0xff] %v1125
                %v1127 = vld [vmem:[%s1077 + $0xc0] sm:$0xff]
                %1128 = vst [vmem:[%s1078 + $0x240] sm:$0xff] %v1127
                %v1129 = vld [vmem:[%s1077 + $0xc8] sm:$0xff]
                %1130 = vst [vmem:[%s1078 + $0x248] sm:$0xff] %v1129
                %v1131 = vld [vmem:[%s1077 + $0xd0] sm:$0xff]
                %1132 = vst [vmem:[%s1078 + $0x250] sm:$0xff] %v1131
                %v1133 = vld [vmem:[%s1077 + $0xd8] sm:$0xff]
                %1134 = vst [vmem:[%s1078 + $0x258] sm:$0xff] %v1133
                %v1135 = vld [vmem:[%s1077 + $0xe0] sm:$0xff]
                %1136 = vst [vmem:[%s1078 + $0x260] sm:$0xff] %v1135
                %v1137 = vld [vmem:[%s1077 + $0xe8] sm:$0xff]
                %1138 = vst [vmem:[%s1078 + $0x268] sm:$0xff] %v1137
                %v1139 = vld [vmem:[%s1077 + $0xf0] sm:$0xff]
                %1140 = vst [vmem:[%s1078 + $0x270] sm:$0xff] %v1139
                %v1141 = vld [vmem:[%s1077 + $0xf8] sm:$0xff]
                %1142 = vst [vmem:[%s1078 + $0x278] sm:$0xff] %v1141
              $region76: #{forward.3} parent=70 // loop_footer
                %s1076 = sadd.s32 1, %s1072
              $region77: #{forward.3} parent=70 // loop_footer_branch
                %1071 = sbr.rel target = $region73
              $region78: #{forward.3} parent=70 // loop_exit
                _
            $region71: #{forward.3} parent=66 // pred_fallthru
              _
            // Predicated region
            $region79: #{forward.3} parent=66 // pred_check
              _
            $region80: #{forward.3} parent=66 // pred_check_branch
              %1144 = sbr.rel target = $region82
            $region81: #{forward.3} parent=66 // pred_region
              _
            $region82: #{forward.3} parent=66 // pred_fallthru
              _
          $region67: #{forward.3} parent=62 // pred_fallthru
            _
          %1145 = vnop
        $region63: #{forward.3} parent=54 // pred_fallthru
          _
      $region55: #{forward.3} parent=5 // pred_fallthru
        _
      %p1146 = scmp.le.s32.totalorder 2, %s10
      // Predicated region
      $region83: #{forward.3} parent=5 // pred_check
        %p1147 = pneg %p1146
      $region84: #{forward.3} parent=5 // pred_check_branch
        %1149 = sbr.rel (%p1147) target = $region86
      $region85: #{forward.3} parent=5 // pred_region
        %s1150 = ssub.s32 %s10, 2
        // Predicated region
        $region87: #{forward.3} parent=85 // pred_check
          %p1151 = pneg %p147
        $region88: #{forward.3} parent=85 // pred_check_branch
          %1153 = sbr.rel (%p1151) target = $region90
        $region89: #{forward.3} parent=85 // pred_region
          %s1154 = sand.u32 %s132, 1
          %s1155 = sand.u32 %s132, 1
          %s1156 = smul.addr %s1155, 256
          %s1157 = scalar_lea.vmem [#allocation3], %s1156
        $region90: #{forward.3} parent=85 // pred_fallthru
          _
      $region86: #{forward.3} parent=5 // pred_fallthru
        _
    $region6: #{forward.3} parent=1 // loop_footer
      %s14 = sadd.s32 1, %s10
    $region7: #{forward.3} parent=1 // loop_footer_branch
      %9 = sbr.rel target = $region3
    $region8: #{forward.3} parent=1 // loop_exit
      _

</llo_original>
